<compile_context>
chip_gen: v7x
topology: tpu7x:2x2x1
jax: 0.10.0
libtpu: 0.0.40
codegen_flags: <defaults>
</compile_context>

<pallas_src>
import math
import numpy as np
import jax
import jax.numpy as jnp
from jax import lax
from jax.experimental import pallas as pl
from jax.experimental.pallas import tpu as pltpu

LEAKY_SLOPE = 0.01
IN_EPS = 1e-5


# ---------------------------------------------------------------------------
# host-side (one-time) constant folding
# ---------------------------------------------------------------------------
def _pad_channels(c: int, width: int) -> int:
    """Smallest cpad >= c with (width * cpad) % 128 == 0 (lane-dense rows);
    falls back to c if that would inflate channels by more than ~4x."""
    m = 128 // math.gcd(width, 128)
    cpad = -(-c // m) * m
    return cpad if cpad <= max(4 * c, 8) else c


def _fold_conv3x3_width(w_oihw: np.ndarray, width: int) -> np.ndarray:
    """Fold the KW width taps + width zero-padding of a 'same' 3x3 conv into a banded
    matrix Rcat of shape (KH*W*Ci, W*Co) such that, with NHWC-flattened rows,
        out[p] = concat([in[p-1], in[p], in[p+1]], lanes) @ Rcat
    where rows in[-1] and in[H] are zeros (height zero-padding)."""
    co, ci, kh_sz, kw_sz = w_oihw.shape
    pad = (kw_sz - 1) // 2
    r = np.zeros((kh_sz, width * ci, width * co), np.float32)
    for kh in range(kh_sz):
        for kw in range(kw_sz):
            for q in range(width):
                w_in = q + kw - pad
                if 0 <= w_in < width:
                    r[kh, w_in * ci:(w_in + 1) * ci, q * co:(q + 1) * co] += \
                        w_oihw[:, :, kh, kw].T
    return r.reshape(kh_sz * width * ci, width * co)


def _fold_transpose2x2(w_iokk: np.ndarray, width: int) -> np.ndarray:
    """ConvTranspose2d(k=2, s=2) folded into one per-row matmul:
    T[j*Ci+ci, ki*(2W*Co) + (2j+kj)*Co + co] = w[ci, co, ki, kj]."""
    ci, co, kh_sz, kw_sz = w_iokk.shape
    t = np.zeros((width * ci, kh_sz * kw_sz * width * co), np.float32)
    for ki in range(kh_sz):
        for kj in range(kw_sz):
            for j in range(width):
                col = ki * (kw_sz * width * co) + (kw_sz * j + kj) * co
                t[j * ci:(j + 1) * ci, col:col + co] += w_iokk[:, :, ki, kj]
    return t


def _channel_sum_matrix(width: int, c: int) -> np.ndarray:
    """M (W*C, C): per-channel sum over the NHWC-flattened lane layout."""
    m = np.zeros((width * c, c), np.float32)
    eye = np.eye(c, dtype=np.float32)
    for q in range(width):
        m[q * c:(q + 1) * c, :] = eye
    return m


# ---------------------------------------------------------------------------
# DecoderBlock builder: folds constants once, returns a jitted apply(x)
# ---------------------------------------------------------------------------
def make_decoder_block(w1, b1, w2, b2, wt, bt, in_shape, *, last_layer=False,
                       batch_block=None):
    """Shapes (PyTorch conventions):
      w1: (Cin, 2*Cin, 3, 3)  b1: (Cin,)    -- conv1
      w2: (Cmid, Cin, 3, 3)   b2: (Cmid,)   -- conv2 (Cmid = out_channels if last_layer else Cin)
      wt: (Cin, Cout, 2, 2)   bt: (Cout,)   -- ConvTranspose2d (only when not last_layer)
      in_shape: (N, 2*Cin, H, W)
    NOTE: b1 (and b2 when followed by InstanceNorm) cancel exactly under the per-channel
    mean subtraction, so they are intentionally unused by the kernel."""
    N, C2, H, W = (int(d) for d in in_shape)
    Cin = C2 // 2
    assert C2 == 2 * Cin
    Cmid = int(np.shape(w2)[0])

    # batch blocking: conv matmuls run with M = b_blk*H rows; keep the "parallel"
    # grid length >= 2 so both v7x TensorCores get work.
    if batch_block is None:
        batch_block = 1
        for cand in (8, 4, 2):
            if N % cand == 0 and N // cand >= 2:
                batch_block = cand
                break
    b_blk = int(batch_block)
    assert N % b_blk == 0, (N, b_blk)

    # pad intermediate channels so W*Cp % 128 == 0 (lane-dense rows, aligned concats);
    # padded channels stay exactly zero through conv / InstanceNorm / LeakyReLU.
    Cp = _pad_channels(Cin, W)

    w1p = np.zeros((Cp, C2, 3, 3), np.float32)
    w1p[:Cin] = np.asarray(w1, np.float32)
    r1 = _fold_conv3x3_width(w1p, W)                         # (3*W*C2, W*Cp)

    m_mat = _channel_sum_matrix(W, Cp)                       # (W*Cp, Cp)

    w2_np = np.asarray(w2, np.float32)
    if last_layer:
        Cout = Cmid
        w2p = np.zeros((Cmid, Cp, 3, 3), np.float32)
        w2p[:, :Cin] = w2_np
        r2 = _fold_conv3x3_width(w2p, W)                     # (3*W*Cp, W*Cout)
        lanes_out = W * Cout
        bias_flat = np.tile(np.asarray(b2, np.float32), W)[None, :]
    else:
        Cout = int(np.shape(wt)[1])
        w2p = np.zeros((Cp, Cp, 3, 3), np.float32)
        w2p[:Cin, :Cin] = w2_np
        r2 = _fold_conv3x3_width(w2p, W)                     # (3*W*Cp, W*Cp)
        wtp = np.zeros((Cp, Cout, 2, 2), np.float32)
        wtp[:Cin] = np.asarray(wt, np.float32)
        t_mat = _fold_transpose2x2(wtp, W)                   # (W*Cp, 4*W*Cout)
        lanes_out = 4 * W * Cout
        bias_flat = np.tile(np.asarray(bt, np.float32), 4 * W)[None, :]

    # bf16 MXU operands (f32 accumulation in-kernel); stats / bias stay f32.
    r1_d = jnp.asarray(r1, jnp.bfloat16)
    r2_d = jnp.asarray(r2, jnp.bfloat16)
    m_d = jnp.asarray(m_mat, jnp.float32)
    mt_d = jnp.asarray(m_mat.T.copy(), jnp.float32)
    bias_d = jnp.asarray(bias_flat, jnp.float32)
    if not last_layer:
        t_d = jnp.asarray(t_mat, jnp.bfloat16)

    hw = float(H * W)

    # ----------------------------- kernel body ------------------------------
    def conv3x3(rows_bf16, r_ref):
        """rows_bf16: (b, H, W*Ci) NHWC-flattened bf16.  One matmul, K = 3*W*Ci."""
        bb, hh, wci = rows_bf16.shape
        zrow = jnp.zeros((bb, 1, wci), rows_bf16.dtype)
        above = jnp.concatenate([zrow, rows_bf16[:, :hh - 1, :]], axis=1)  # in[p-1]
        below = jnp.concatenate([rows_bf16[:, 1:, :], zrow], axis=1)       # in[p+1]
        taps = jnp.concatenate([above, rows_bf16, below], axis=2)          # (b, H, 3*W*Ci)
        y = jnp.dot(taps.reshape(bb * hh, 3 * wci), r_ref[...],
                    preferred_element_type=jnp.float32)
        return y.reshape(bb, hh, y.shape[-1])                              # f32

    def inorm_lrelu(y, m_ref, mt_ref):
        """InstanceNorm2d(affine=False) + LeakyReLU on NHWC-flattened rows (all f32)."""
        s1 = jnp.sum(y, axis=1)                                            # (b, W*Cp)
        s2 = jnp.sum(y * y, axis=1)
        cs1 = jnp.dot(s1, m_ref[...], preferred_element_type=jnp.float32)  # (b, Cp)
        cs2 = jnp.dot(s2, m_ref[...], preferred_element_type=jnp.float32)
        mean = cs1 / hw
        var = cs2 / hw - mean * mean
        inv = lax.rsqrt(var + IN_EPS)
        scale = jnp.dot(inv, mt_ref[...], preferred_element_type=jnp.float32)
        shift = jnp.dot(-mean * inv, mt_ref[...], preferred_element_type=jnp.float32)
        yn = y * scale[:, None, :] + shift[:, None, :]
        return jnp.where(yn >= 0, yn, LEAKY_SLOPE * yn)

    def kernel_full(x_ref, r1_ref, r2_ref, t_ref, m_ref, mt_ref, b_ref, o_ref):
        h1 = inorm_lrelu(conv3x3(x_ref[...], r1_ref), m_ref, mt_ref)
        h2 = inorm_lrelu(conv3x3(h1.astype(jnp.bfloat16), r2_ref), m_ref, mt_ref)
        z = jnp.dot(h2.astype(jnp.bfloat16).reshape(b_blk * H, -1), t_ref[...],
                    preferred_element_type=jnp.float32)                    # (b*H, 4*W*Cout)
        o_ref[...] = (z.reshape(b_blk, H, lanes_out) + b_ref[...]).astype(o_ref.dtype)

    def kernel_last(x_ref, r1_ref, r2_ref, m_ref, mt_ref, b_ref, o_ref):
        h1 = inorm_lrelu(conv3x3(x_ref[...], r1_ref), m_ref, mt_ref)
        y2 = conv3x3(h1.astype(jnp.bfloat16), r2_ref)                      # (b, H, W*Cout)
        o_ref[...] = (y2 + b_ref[...]).astype(o_ref.dtype)

    if last_layer:
        kernel = kernel_last
        consts = (r1_d, r2_d, m_d, mt_d, bias_d)
    else:
        kernel = kernel_full
        consts = (r1_d, r2_d, t_d, m_d, mt_d, bias_d)

    def _const_spec(arr):
        # Grid-invariant constants: constant index_map, nothing re-fetched per step.
        # (Production sizes: add pipeline_mode=pl.Buffered(1) here + column-tile the
        #  output and set vmem_limit_bytes; negligible at these shapes.)
        return pl.BlockSpec(tuple(arr.shape), lambda n, _r=arr.ndim: (0,) * _r)

    flops = 2 * N * H * ((3 * W * C2) * (W * Cp)
                         + (3 * W * Cp) * (W * Cmid if last_layer else W * Cp)
                         + (0 if last_layer else (W * Cp) * lanes_out))
    bytes_accessed = (N * H * W * C2 * 2 + N * H * lanes_out * 4
                      + sum(int(c.size) * c.dtype.itemsize for c in consts))
    cost = pl.CostEstimate(flops=int(flops),
                           transcendentals=int((1 if last_layer else 2) * N * Cp),
                           bytes_accessed=int(bytes_accessed))

    pallas_fn = pl.pallas_call(
        kernel,
        out_shape=jax.ShapeDtypeStruct((N, H, lanes_out), jnp.float32),
        grid_spec=pltpu.PrefetchScalarGridSpec(
            num_scalar_prefetch=0,
            grid=(N // b_blk,),
            in_specs=[pl.BlockSpec((b_blk, H, W * C2), lambda n: (n, 0, 0))]
                     + [_const_spec(c) for c in consts],
            out_specs=pl.BlockSpec((b_blk, H, lanes_out), lambda n: (n, 0, 0)),
        ),
        compiler_params=pltpu.CompilerParams(dimension_semantics=("parallel",)),
        cost_estimate=cost,
    )

    @jax.jit
    def apply(x):
        # NCHW -> NHWC-flattened bf16 rows (W*2Cin lanes; 128 here -> lane-dense).
        x_flat = jnp.transpose(x, (0, 2, 3, 1)).reshape(N, H, W * C2).astype(jnp.bfloat16)
        o_flat = pallas_fn(x_flat, *consts)
        if last_layer:
            out = o_flat.reshape(N, H, W, Cout)
            return jnp.transpose(out, (0, 3, 1, 2))                        # NCHW
        out = o_flat.reshape(N, H, 2, 2 * W, Cout)                         # (n, i, ki, 2j+kj, co)
        return jnp.transpose(out, (0, 4, 1, 2, 3)).reshape(N, Cout, 2 * H, 2 * W)

    return apply


# ---------------------------------------------------------------------------
# pure-JAX f32 reference of DecoderBlock.forward
# ---------------------------------------------------------------------------
def reference(x, w1, b1, w2, b2, wt, bt, *, last_layer=False):
    def conv(h, w, b):
        y = lax.conv_general_dilated(h, w, (1, 1), [(1, 1), (1, 1)],
                                     dimension_numbers=('NCHW', 'OIHW', 'NCHW'))
        return y + b[None, :, None, None]

    def inorm(h):
        mu = jnp.mean(h, axis=(2, 3), keepdims=True)
        var = jnp.var(h, axis=(2, 3), keepdims=True)
        return (h - mu) / jnp.sqrt(var + IN_EPS)

    def lrelu(h):
        return jnp.where(h >= 0, h, LEAKY_SLOPE * h)

    h = lrelu(inorm(conv(x, w1, b1)))
    h = conv(h, w2, b2)
    if last_layer:
        return h
    h = lrelu(inorm(h))
    n, _, hh, ww = h.shape
    co = wt.shape[1]
    z = jnp.einsum('nchw,cokl->nohkwl', h, wt).reshape(n, co, 2 * hh, 2 * ww)
    return z + bt[None, :, None, None]


if __name__ == "__main__":
    key = jax.random.PRNGKey(0)
    ks = jax.random.split(key, 9)
    # DecoderBlock(in_channels=4, out_channels=4): forward consumes 2*in_channels channels.
    N, Cin, Cout, H, W = 2, 4, 4, 16, 16
    C2 = 2 * Cin

    x = jax.random.normal(ks[0], (N, C2, H, W), jnp.float32)
    w1 = jax.random.normal(ks[1], (Cin, C2, 3, 3), jnp.float32) / float(np.sqrt(C2 * 9))
    b1 = jax.random.normal(ks[2], (Cin,), jnp.float32) * 0.1
    w2 = jax.random.normal(ks[3], (Cin, Cin, 3, 3), jnp.float32) / float(np.sqrt(Cin * 9))
    b2 = jax.random.normal(ks[4], (Cin,), jnp.float32) * 0.1
    wt = jax.random.normal(ks[5], (Cin, Cout, 2, 2), jnp.float32) / float(np.sqrt(Cin * 4))
    bt = jax.random.normal(ks[6], (Cout,), jnp.float32) * 0.1

    # ---- default branch (last_layer=False): conv1+IN+LReLU -> conv2+IN+LReLU -> transpose
    block = make_decoder_block(w1, b1, w2, b2, wt, bt, x.shape, last_layer=False)
    out = jax.block_until_ready(block(x))
    ref = reference(x, w1, b1, w2, b2, wt, bt, last_layer=False)
    assert out.shape == (N, Cout, 2 * H, 2 * W), out.shape
    np.testing.assert_allclose(np.asarray(out), np.asarray(ref), rtol=5e-2, atol=5e-2)

    # ---- last_layer=True branch: conv1+IN+LReLU -> conv2 (bias kept, no norm/act), no transpose
    w2l = jax.random.normal(ks[7], (Cout, Cin, 3, 3), jnp.float32) / float(np.sqrt(Cin * 9))
    b2l = jax.random.normal(ks[8], (Cout,), jnp.float32) * 0.1
    block_last = make_decoder_block(w1, b1, w2l, b2l, None, None, x.shape, last_layer=True)
    out_l = jax.block_until_ready(block_last(x))
    ref_l = reference(x, w1, b1, w2l, b2l, None, None, last_layer=True)
    assert out_l.shape == (N, Cout, H, W), out_l.shape
    np.testing.assert_allclose(np.asarray(out_l), np.asarray(ref_l), rtol=5e-2, atol=5e-2)

    print("KERNEL_OK")
</pallas_src>

<mosaic_0001>
module attributes {stable_mosaic.version = 11 : i64} {
  func.func @kernel_full(%arg0: i32, %arg1: memref<1x16x128xbf16, #tpu.memory_space<vmem>>, %arg2: memref<384x128xbf16, #tpu.memory_space<vmem>>, %arg3: memref<384x128xbf16, #tpu.memory_space<vmem>>, %arg4: memref<128x256xbf16, #tpu.memory_space<vmem>>, %arg5: memref<128x8xf32, #tpu.memory_space<vmem>>, %arg6: memref<8x128xf32, #tpu.memory_space<vmem>>, %arg7: memref<1x256xf32, #tpu.memory_space<vmem>>, %arg8: memref<1x16x256xf32, #tpu.memory_space<vmem>>) attributes {dimension_semantics = [#tpu.dimension_semantics<parallel>], iteration_bounds = array<i64: 2>, scalar_prefetch = 0 : i64, scratch_operands = 0 : i64, tpu.core_type = #tpu.core_type<tc>, window_params = [{transform_indices = @transform_0, window_bounds = array<i64: 1, 16, 128>}, {pipeline_mode = #tpu.pipeline_mode<synchronous>, transform_indices = @transform_1, window_bounds = array<i64: 384, 128>}, {pipeline_mode = #tpu.pipeline_mode<synchronous>, transform_indices = @transform_2, window_bounds = array<i64: 384, 128>}, {pipeline_mode = #tpu.pipeline_mode<synchronous>, transform_indices = @transform_3, window_bounds = array<i64: 128, 256>}, {pipeline_mode = #tpu.pipeline_mode<synchronous>, transform_indices = @transform_4, window_bounds = array<i64: 128, 8>}, {pipeline_mode = #tpu.pipeline_mode<synchronous>, transform_indices = @transform_5, window_bounds = array<i64: 8, 128>}, {pipeline_mode = #tpu.pipeline_mode<synchronous>, transform_indices = @transform_6, window_bounds = array<i64: 1, 256>}, {transform_indices = @transform_7, window_bounds = array<i64: 1, 16, 256>}]} {
    %c0 = arith.constant 0 : index
    %c0_0 = arith.constant 0 : index
    %c0_1 = arith.constant 0 : index
    %0 = vector.load %arg1[%c0, %c0_0, %c0_1] : memref<1x16x128xbf16, #tpu.memory_space<vmem>>, vector<1x16x128xbf16>
    %cst = arith.constant 0.000000e+00 : bf16
    %1 = vector.broadcast %cst : bf16 to vector<1x1x128xbf16>
    %2 = vector.extract_strided_slice %0 {offsets = [0, 0, 0], sizes = [1, 15, 128], strides = [1, 1, 1]} : vector<1x16x128xbf16> to vector<1x15x128xbf16>
    %3 = tpu.concatenate %1, %2 in 1 : vector<1x1x128xbf16>, vector<1x15x128xbf16> -> vector<1x16x128xbf16>
    %4 = vector.extract_strided_slice %0 {offsets = [0, 1, 0], sizes = [1, 15, 128], strides = [1, 1, 1]} : vector<1x16x128xbf16> to vector<1x15x128xbf16>
    %5 = tpu.concatenate %4, %1 in 1 : vector<1x15x128xbf16>, vector<1x1x128xbf16> -> vector<1x16x128xbf16>
    %6 = tpu.concatenate %3, %0, %5 in 2 : vector<1x16x128xbf16>, vector<1x16x128xbf16>, vector<1x16x128xbf16> -> vector<1x16x384xbf16>
    %7 = vector.shape_cast %6 : vector<1x16x384xbf16> to vector<16x384xbf16>
    %c0_2 = arith.constant 0 : index
    %c0_3 = arith.constant 0 : index
    %8 = vector.load %arg2[%c0_2, %c0_3] : memref<384x128xbf16, #tpu.memory_space<vmem>>, vector<384x128xbf16>
    %cst_4 = arith.constant dense<0.000000e+00> : vector<16x128xf32>
    %9 = tpu.matmul %7, %8, %cst_4 {dimension_numbers = #tpu.dot_dimension_numbers<[1], [0], [0], [1], [0, 0, 1, 1], [], []>} : vector<16x384xbf16>, vector<384x128xbf16>, vector<16x128xf32> -> vector<16x128xf32>
    %10 = vector.shape_cast %9 : vector<16x128xf32> to vector<1x16x128xf32>
    %cst_5 = arith.constant dense<0.000000e+00> : vector<1x128xf32>
    %11 = vector.multi_reduction <add>, %10, %cst_5 [1] : vector<1x16x128xf32> to vector<1x128xf32>
    %12 = arith.mulf %10, %10 : vector<1x16x128xf32>
    %cst_6 = arith.constant dense<0.000000e+00> : vector<1x128xf32>
    %13 = vector.multi_reduction <add>, %12, %cst_6 [1] : vector<1x16x128xf32> to vector<1x128xf32>
    %c0_7 = arith.constant 0 : index
    %c0_8 = arith.constant 0 : index
    %14 = vector.load %arg5[%c0_7, %c0_8] : memref<128x8xf32, #tpu.memory_space<vmem>>, vector<128x8xf32>
    %cst_9 = arith.constant dense<0.000000e+00> : vector<1x8xf32>
    %15 = tpu.matmul %11, %14, %cst_9 {dimension_numbers = #tpu.dot_dimension_numbers<[1], [0], [0], [1], [0, 0, 1, 1], [], []>} : vector<1x128xf32>, vector<128x8xf32>, vector<1x8xf32> -> vector<1x8xf32>
    %c0_10 = arith.constant 0 : index
    %c0_11 = arith.constant 0 : index
    %16 = vector.load %arg5[%c0_10, %c0_11] : memref<128x8xf32, #tpu.memory_space<vmem>>, vector<128x8xf32>
    %cst_12 = arith.constant dense<0.000000e+00> : vector<1x8xf32>
    %17 = tpu.matmul %13, %16, %cst_12 {dimension_numbers = #tpu.dot_dimension_numbers<[1], [0], [0], [1], [0, 0, 1, 1], [], []>} : vector<1x128xf32>, vector<128x8xf32>, vector<1x8xf32> -> vector<1x8xf32>
    %cst_13 = arith.constant 2.560000e+02 : f32
    %18 = vector.broadcast %cst_13 : f32 to vector<1x8xf32>
    %19 = arith.divf %15, %18 : vector<1x8xf32>
    %cst_14 = arith.constant 2.560000e+02 : f32
    %20 = vector.broadcast %cst_14 : f32 to vector<1x8xf32>
    %21 = arith.divf %17, %20 : vector<1x8xf32>
    %22 = arith.mulf %19, %19 : vector<1x8xf32>
    %23 = arith.subf %21, %22 : vector<1x8xf32>
    %cst_15 = arith.constant 9.99999974E-6 : f32
    %24 = vector.broadcast %cst_15 : f32 to vector<1x8xf32>
    %25 = arith.addf %23, %24 : vector<1x8xf32>
    %26 = math.rsqrt %25 : vector<1x8xf32>
    %c0_16 = arith.constant 0 : index
    %c0_17 = arith.constant 0 : index
    %27 = vector.load %arg6[%c0_16, %c0_17] : memref<8x128xf32, #tpu.memory_space<vmem>>, vector<8x128xf32>
    %cst_18 = arith.constant dense<0.000000e+00> : vector<1x128xf32>
    %28 = tpu.matmul %26, %27, %cst_18 {dimension_numbers = #tpu.dot_dimension_numbers<[1], [0], [0], [1], [0, 0, 1, 1], [], []>} : vector<1x8xf32>, vector<8x128xf32>, vector<1x128xf32> -> vector<1x128xf32>
    %cst_19 = arith.constant 0.000000e+00 : f32
    %29 = vector.broadcast %cst_19 : f32 to vector<1x8xf32>
    %30 = arith.subf %29, %19 : vector<1x8xf32>
    %31 = arith.mulf %30, %26 : vector<1x8xf32>
    %c0_20 = arith.constant 0 : index
    %c0_21 = arith.constant 0 : index
    %32 = vector.load %arg6[%c0_20, %c0_21] : memref<8x128xf32, #tpu.memory_space<vmem>>, vector<8x128xf32>
    %cst_22 = arith.constant dense<0.000000e+00> : vector<1x128xf32>
    %33 = tpu.matmul %31, %32, %cst_22 {dimension_numbers = #tpu.dot_dimension_numbers<[1], [0], [0], [1], [0, 0, 1, 1], [], []>} : vector<1x8xf32>, vector<8x128xf32>, vector<1x128xf32> -> vector<1x128xf32>
    %34 = vector.shape_cast %28 : vector<1x128xf32> to vector<1x1x128xf32>
    %35 = vector.broadcast %34 : vector<1x1x128xf32> to vector<1x16x128xf32>
    %36 = arith.mulf %10, %35 : vector<1x16x128xf32>
    %37 = vector.shape_cast %33 : vector<1x128xf32> to vector<1x1x128xf32>
    %38 = vector.broadcast %37 : vector<1x1x128xf32> to vector<1x16x128xf32>
    %39 = arith.addf %36, %38 : vector<1x16x128xf32>
    %cst_23 = arith.constant 0.000000e+00 : f32
    %40 = vector.broadcast %cst_23 : f32 to vector<1x16x128xf32>
    %41 = arith.cmpf oge, %39, %40 : vector<1x16x128xf32>
    %cst_24 = arith.constant 0.00999999977 : f32
    %42 = vector.broadcast %cst_24 : f32 to vector<1x16x128xf32>
    %43 = arith.mulf %42, %39 : vector<1x16x128xf32>
    %44 = arith.select %41, %39, %43 : vector<1x16x128xi1>, vector<1x16x128xf32>
    %45 = arith.truncf %44 : vector<1x16x128xf32> to vector<1x16x128xbf16>
    %cst_25 = arith.constant 0.000000e+00 : bf16
    %46 = vector.broadcast %cst_25 : bf16 to vector<1x1x128xbf16>
    %47 = vector.extract_strided_slice %45 {offsets = [0, 0, 0], sizes = [1, 15, 128], strides = [1, 1, 1]} : vector<1x16x128xbf16> to vector<1x15x128xbf16>
    %48 = tpu.concatenate %46, %47 in 1 : vector<1x1x128xbf16>, vector<1x15x128xbf16> -> vector<1x16x128xbf16>
    %49 = vector.extract_strided_slice %45 {offsets = [0, 1, 0], sizes = [1, 15, 128], strides = [1, 1, 1]} : vector<1x16x128xbf16> to vector<1x15x128xbf16>
    %50 = tpu.concatenate %49, %46 in 1 : vector<1x15x128xbf16>, vector<1x1x128xbf16> -> vector<1x16x128xbf16>
    %51 = tpu.concatenate %48, %45, %50 in 2 : vector<1x16x128xbf16>, vector<1x16x128xbf16>, vector<1x16x128xbf16> -> vector<1x16x384xbf16>
    %52 = vector.shape_cast %51 : vector<1x16x384xbf16> to vector<16x384xbf16>
    %c0_26 = arith.constant 0 : index
    %c0_27 = arith.constant 0 : index
    %53 = vector.load %arg3[%c0_26, %c0_27] : memref<384x128xbf16, #tpu.memory_space<vmem>>, vector<384x128xbf16>
    %cst_28 = arith.constant dense<0.000000e+00> : vector<16x128xf32>
    %54 = tpu.matmul %52, %53, %cst_28 {dimension_numbers = #tpu.dot_dimension_numbers<[1], [0], [0], [1], [0, 0, 1, 1], [], []>} : vector<16x384xbf16>, vector<384x128xbf16>, vector<16x128xf32> -> vector<16x128xf32>
    %55 = vector.shape_cast %54 : vector<16x128xf32> to vector<1x16x128xf32>
    %cst_29 = arith.constant dense<0.000000e+00> : vector<1x128xf32>
    %56 = vector.multi_reduction <add>, %55, %cst_29 [1] : vector<1x16x128xf32> to vector<1x128xf32>
    %57 = arith.mulf %55, %55 : vector<1x16x128xf32>
    %cst_30 = arith.constant dense<0.000000e+00> : vector<1x128xf32>
    %58 = vector.multi_reduction <add>, %57, %cst_30 [1] : vector<1x16x128xf32> to vector<1x128xf32>
    %c0_31 = arith.constant 0 : index
    %c0_32 = arith.constant 0 : index
    %59 = vector.load %arg5[%c0_31, %c0_32] : memref<128x8xf32, #tpu.memory_space<vmem>>, vector<128x8xf32>
    %cst_33 = arith.constant dense<0.000000e+00> : vector<1x8xf32>
    %60 = tpu.matmul %56, %59, %cst_33 {dimension_numbers = #tpu.dot_dimension_numbers<[1], [0], [0], [1], [0, 0, 1, 1], [], []>} : vector<1x128xf32>, vector<128x8xf32>, vector<1x8xf32> -> vector<1x8xf32>
    %c0_34 = arith.constant 0 : index
    %c0_35 = arith.constant 0 : index
    %61 = vector.load %arg5[%c0_34, %c0_35] : memref<128x8xf32, #tpu.memory_space<vmem>>, vector<128x8xf32>
    %cst_36 = arith.constant dense<0.000000e+00> : vector<1x8xf32>
    %62 = tpu.matmul %58, %61, %cst_36 {dimension_numbers = #tpu.dot_dimension_numbers<[1], [0], [0], [1], [0, 0, 1, 1], [], []>} : vector<1x128xf32>, vector<128x8xf32>, vector<1x8xf32> -> vector<1x8xf32>
    %cst_37 = arith.constant 2.560000e+02 : f32
    %63 = vector.broadcast %cst_37 : f32 to vector<1x8xf32>
    %64 = arith.divf %60, %63 : vector<1x8xf32>
    %cst_38 = arith.constant 2.560000e+02 : f32
    %65 = vector.broadcast %cst_38 : f32 to vector<1x8xf32>
    %66 = arith.divf %62, %65 : vector<1x8xf32>
    %67 = arith.mulf %64, %64 : vector<1x8xf32>
    %68 = arith.subf %66, %67 : vector<1x8xf32>
    %cst_39 = arith.constant 9.99999974E-6 : f32
    %69 = vector.broadcast %cst_39 : f32 to vector<1x8xf32>
    %70 = arith.addf %68, %69 : vector<1x8xf32>
    %71 = math.rsqrt %70 : vector<1x8xf32>
    %c0_40 = arith.constant 0 : index
    %c0_41 = arith.constant 0 : index
    %72 = vector.load %arg6[%c0_40, %c0_41] : memref<8x128xf32, #tpu.memory_space<vmem>>, vector<8x128xf32>
    %cst_42 = arith.constant dense<0.000000e+00> : vector<1x128xf32>
    %73 = tpu.matmul %71, %72, %cst_42 {dimension_numbers = #tpu.dot_dimension_numbers<[1], [0], [0], [1], [0, 0, 1, 1], [], []>} : vector<1x8xf32>, vector<8x128xf32>, vector<1x128xf32> -> vector<1x128xf32>
    %cst_43 = arith.constant 0.000000e+00 : f32
    %74 = vector.broadcast %cst_43 : f32 to vector<1x8xf32>
    %75 = arith.subf %74, %64 : vector<1x8xf32>
    %76 = arith.mulf %75, %71 : vector<1x8xf32>
    %c0_44 = arith.constant 0 : index
    %c0_45 = arith.constant 0 : index
    %77 = vector.load %arg6[%c0_44, %c0_45] : memref<8x128xf32, #tpu.memory_space<vmem>>, vector<8x128xf32>
    %cst_46 = arith.constant dense<0.000000e+00> : vector<1x128xf32>
    %78 = tpu.matmul %76, %77, %cst_46 {dimension_numbers = #tpu.dot_dimension_numbers<[1], [0], [0], [1], [0, 0, 1, 1], [], []>} : vector<1x8xf32>, vector<8x128xf32>, vector<1x128xf32> -> vector<1x128xf32>
    %79 = vector.shape_cast %73 : vector<1x128xf32> to vector<1x1x128xf32>
    %80 = vector.broadcast %79 : vector<1x1x128xf32> to vector<1x16x128xf32>
    %81 = arith.mulf %55, %80 : vector<1x16x128xf32>
    %82 = vector.shape_cast %78 : vector<1x128xf32> to vector<1x1x128xf32>
    %83 = vector.broadcast %82 : vector<1x1x128xf32> to vector<1x16x128xf32>
    %84 = arith.addf %81, %83 : vector<1x16x128xf32>
    %cst_47 = arith.constant 0.000000e+00 : f32
    %85 = vector.broadcast %cst_47 : f32 to vector<1x16x128xf32>
    %86 = arith.cmpf oge, %84, %85 : vector<1x16x128xf32>
    %cst_48 = arith.constant 0.00999999977 : f32
    %87 = vector.broadcast %cst_48 : f32 to vector<1x16x128xf32>
    %88 = arith.mulf %87, %84 : vector<1x16x128xf32>
    %89 = arith.select %86, %84, %88 : vector<1x16x128xi1>, vector<1x16x128xf32>
    %90 = arith.truncf %89 : vector<1x16x128xf32> to vector<1x16x128xbf16>
    %91 = vector.shape_cast %90 : vector<1x16x128xbf16> to vector<16x128xbf16>
    %c0_49 = arith.constant 0 : index
    %c0_50 = arith.constant 0 : index
    %92 = vector.load %arg4[%c0_49, %c0_50] : memref<128x256xbf16, #tpu.memory_space<vmem>>, vector<128x256xbf16>
    %cst_51 = arith.constant dense<0.000000e+00> : vector<16x256xf32>
    %93 = tpu.matmul %91, %92, %cst_51 {dimension_numbers = #tpu.dot_dimension_numbers<[1], [0], [0], [1], [0, 0, 1, 1], [], []>} : vector<16x128xbf16>, vector<128x256xbf16>, vector<16x256xf32> -> vector<16x256xf32>
    %94 = vector.shape_cast %93 : vector<16x256xf32> to vector<1x16x256xf32>
    %c0_52 = arith.constant 0 : index
    %c0_53 = arith.constant 0 : index
    %95 = vector.load %arg7[%c0_52, %c0_53] : memref<1x256xf32, #tpu.memory_space<vmem>>, vector<1x256xf32>
    %96 = vector.shape_cast %95 : vector<1x256xf32> to vector<1x1x256xf32>
    %97 = vector.broadcast %96 : vector<1x1x256xf32> to vector<1x16x256xf32>
    %98 = arith.addf %94, %97 : vector<1x16x256xf32>
    %c0_54 = arith.constant 0 : index
    %c0_55 = arith.constant 0 : index
    %c0_56 = arith.constant 0 : index
    %99 = vector.load %arg8[%c0_54, %c0_55, %c0_56] : memref<1x16x256xf32, #tpu.memory_space<vmem>>, vector<1x16x256xf32>
    tpu.vector_store %arg8[%c0_54, %c0_55, %c0_56], %98 {strides = array<i32>} : memref<1x16x256xf32, #tpu.memory_space<vmem>>, vector<1x16x256xf32>,
    return
  }
  func.func @transform_0(%arg0: i32) -> (i32, i32, i32) {
    %c0_i32 = arith.constant 0 : i32
    %c0_i32_0 = arith.constant 0 : i32
    %c0_i32_1 = arith.constant 0 : i32
    return %arg0, %c0_i32, %c0_i32_0 : i32, i32, i32
  }
  func.func @transform_1(%arg0: i32) -> (i32, i32) {
    %c0_i32 = arith.constant 0 : i32
    %c0_i32_0 = arith.constant 0 : i32
    %c0_i32_1 = arith.constant 0 : i32
    return %c0_i32, %c0_i32_0 : i32, i32
  }
  func.func @transform_2(%arg0: i32) -> (i32, i32) {
    %c0_i32 = arith.constant 0 : i32
    %c0_i32_0 = arith.constant 0 : i32
    %c0_i32_1 = arith.constant 0 : i32
    return %c0_i32, %c0_i32_0 : i32, i32
  }
  func.func @transform_3(%arg0: i32) -> (i32, i32) {
    %c0_i32 = arith.constant 0 : i32
    %c0_i32_0 = arith.constant 0 : i32
    %c0_i32_1 = arith.constant 0 : i32
    return %c0_i32, %c0_i32_0 : i32, i32
  }
  func.func @transform_4(%arg0: i32) -> (i32, i32) {
    %c0_i32 = arith.constant 0 : i32
    %c0_i32_0 = arith.constant 0 : i32
    %c0_i32_1 = arith.constant 0 : i32
    return %c0_i32, %c0_i32_0 : i32, i32
  }
  func.func @transform_5(%arg0: i32) -> (i32, i32) {
    %c0_i32 = arith.constant 0 : i32
    %c0_i32_0 = arith.constant 0 : i32
    %c0_i32_1 = arith.constant 0 : i32
    return %c0_i32, %c0_i32_0 : i32, i32
  }
  func.func @transform_6(%arg0: i32) -> (i32, i32) {
    %c0_i32 = arith.constant 0 : i32
    %c0_i32_0 = arith.constant 0 : i32
    %c0_i32_1 = arith.constant 0 : i32
    return %c0_i32, %c0_i32_0 : i32, i32
  }
  func.func @transform_7(%arg0: i32) -> (i32, i32, i32) {
    %c0_i32 = arith.constant 0 : i32
    %c0_i32_0 = arith.constant 0 : i32
    %c0_i32_1 = arith.constant 0 : i32
    return %arg0, %c0_i32, %c0_i32_0 : i32, i32, i32
  }
}

</mosaic_0001>

<llo_original>
// kernel: apply.1
$region0: #{apply.1}
  #allocation0 [shape = 'u32[]', space=smem, size = 0x4, offset = 0x4, fixed_abs, tag = 'smem constant byte address 0x4 - core index']
  #allocation1 [shape = 'u32[144,128]{1,0:T(1,128)}', space=vmem, size = 0x12000, scoped, tag = 'internal scratch']
  %s0 = inlined_call_operand.vmem [shape: bf16[2,16,128], index: 0, kind: input, shape index: {}]
  %s1 = inlined_call_operand.vmem [shape: bf16[384,128], index: 1, kind: input, shape index: {}]
  %s2 = inlined_call_operand.vmem [shape: bf16[384,128], index: 2, kind: input, shape index: {}]
  %s3 = inlined_call_operand.vmem [shape: bf16[128,256], index: 3, kind: input, shape index: {}]
  %s4 = inlined_call_operand.vmem [shape: f32[128,8], index: 4, kind: input, shape index: {}]
  %s5 = inlined_call_operand.vmem [shape: f32[8,128], index: 5, kind: input, shape index: {}]
  %s6 = inlined_call_operand.vmem [shape: f32[1,256], index: 6, kind: input, shape index: {}]
  %s7 = inlined_call_operand.vmem [shape: f32[2,16,256], index: 7, kind: output, shape index: {}]
  %s8 = sld [smem:[#allocation0]]
  $region61: #{apply.1} parent=0
    _
  %s10 = ssub.s32 1, %s8
  %s11 = scalar_select 0, %s10, %s8
  loop: start=0, step=1, limit=4
  $region2: #{apply.1} parent=0 // loop_pre_header
    _
  $region3: #{apply.1} parent=0 // loop_header
    %s13 = sphi 0, %s17
    %p14 = scmp.ge.s32.totalorder %s13, 4
    %s23 = sphi 0, %s25
    %s26 = sphi 0, %s23
    %s27 = sphi 0, %s26
    %s43 = sphi 0, %s27
    %s47 = sphi 0, %s47
    %s49 = sphi 0, %s47
    %s50 = sphi 0, %s49
    %s64 = sphi 0, %s50
    %s68 = sphi 0, %s68
    %s70 = sphi 0, %s68
    %s71 = sphi 0, %s70
    %s85 = sphi 0, %s71
    %s89 = sphi 0, %s89
    %s91 = sphi 0, %s89
    %s92 = sphi 0, %s91
    %s106 = sphi 0, %s92
    %s110 = sphi 0, %s110
    %s112 = sphi 0, %s110
    %s113 = sphi 0, %s112
    %s127 = sphi 0, %s113
    %s131 = sphi 0, %s131
    %s133 = sphi 0, %s131
    %s134 = sphi 0, %s133
    %s148 = sphi 0, %s134
    %s152 = sphi 0, %s152
    %s154 = sphi 0, %s152
    %s155 = sphi 0, %s154
    %s169 = sphi 0, %s155
    %s175 = sphi 0, %s177
    %s178 = sphi 0, %s175
    %s179 = sphi 0, %s178
    %s195 = sphi 0, %s179
  $region4: #{apply.1} parent=0 // loop_header_branch
    %16 = sbr.rel (%p14) target = $region8
  $region5: #{apply.1} parent=0 // loop_body
    %s18 = ssub.s32 %s13, 1
    %s19 = ssub.s32 %s13, 2
    %s20 = sadd.s32 %s13, 1
    %s21 = ssub.s32 %s13, %s20
    %p22 = scmp.eq.s32.totalorder %s21, 0
    %s24 = sadd.s32 %s23, 1
    %s25 = scalar_select %p22, %s23, %s24
    %p28 = pneg %p22
    %p29 = scmp.eq.s32.totalorder %s13, 1
    %p30 = por %p28, %p29
    %p31 = scmp.ne.s32.totalorder %s23, %s26
    %p32 = scmp.eq.s32.totalorder %s13, 0
    %p33 = por %p31, %p32
    %p34 = scmp.ne.s32.totalorder %s23, %s26
    %p35 = scmp.eq.s32.totalorder %s18, 1
    %p36 = por %p34, %p35
    %p37 = scmp.ne.s32.totalorder %s26, %s27
    %p38 = scmp.eq.s32.totalorder %s18, 0
    %p39 = por %p37, %p38
    %p40 = scmp.ne.s32.totalorder %s26, %s27
    %p41 = scmp.eq.s32.totalorder %s19, 1
    %p42 = por %p40, %p41
    %p44 = scmp.ne.s32.totalorder %s27, %s43
    %p45 = scmp.eq.s32.totalorder %s19, 0
    %p46 = por %p44, %p45
    %s48 = sadd.s32 %s47, 1
    %p51 = scmp.eq.s32.totalorder %s13, 1
    %p52 = scmp.ne.s32.totalorder %s47, %s49
    %p53 = scmp.eq.s32.totalorder %s13, 0
    %p54 = por %p52, %p53
    %p55 = scmp.ne.s32.totalorder %s47, %s49
    %p56 = scmp.eq.s32.totalorder %s18, 1
    %p57 = por %p55, %p56
    %p58 = scmp.ne.s32.totalorder %s49, %s50
    %p59 = scmp.eq.s32.totalorder %s18, 0
    %p60 = por %p58, %p59
    %p61 = scmp.ne.s32.totalorder %s49, %s50
    %p62 = scmp.eq.s32.totalorder %s19, 1
    %p63 = por %p61, %p62
    %p65 = scmp.ne.s32.totalorder %s50, %s64
    %p66 = scmp.eq.s32.totalorder %s19, 0
    %p67 = por %p65, %p66
    %s69 = sadd.s32 %s68, 1
    %p72 = scmp.eq.s32.totalorder %s13, 1
    %p73 = scmp.ne.s32.totalorder %s68, %s70
    %p74 = scmp.eq.s32.totalorder %s13, 0
    %p75 = por %p73, %p74
    %p76 = scmp.ne.s32.totalorder %s68, %s70
    %p77 = scmp.eq.s32.totalorder %s18, 1
    %p78 = por %p76, %p77
    %p79 = scmp.ne.s32.totalorder %s70, %s71
    %p80 = scmp.eq.s32.totalorder %s18, 0
    %p81 = por %p79, %p80
    %p82 = scmp.ne.s32.totalorder %s70, %s71
    %p83 = scmp.eq.s32.totalorder %s19, 1
    %p84 = por %p82, %p83
    %p86 = scmp.ne.s32.totalorder %s71, %s85
    %p87 = scmp.eq.s32.totalorder %s19, 0
    %p88 = por %p86, %p87
    %s90 = sadd.s32 %s89, 1
    %p93 = scmp.eq.s32.totalorder %s13, 1
    %p94 = scmp.ne.s32.totalorder %s89, %s91
    %p95 = scmp.eq.s32.totalorder %s13, 0
    %p96 = por %p94, %p95
    %p97 = scmp.ne.s32.totalorder %s89, %s91
    %p98 = scmp.eq.s32.totalorder %s18, 1
    %p99 = por %p97, %p98
    %p100 = scmp.ne.s32.totalorder %s91, %s92
    %p101 = scmp.eq.s32.totalorder %s18, 0
    %p102 = por %p100, %p101
    %p103 = scmp.ne.s32.totalorder %s91, %s92
    %p104 = scmp.eq.s32.totalorder %s19, 1
    %p105 = por %p103, %p104
    %p107 = scmp.ne.s32.totalorder %s92, %s106
    %p108 = scmp.eq.s32.totalorder %s19, 0
    %p109 = por %p107, %p108
    %s111 = sadd.s32 %s110, 1
    %p114 = scmp.eq.s32.totalorder %s13, 1
    %p115 = scmp.ne.s32.totalorder %s110, %s112
    %p116 = scmp.eq.s32.totalorder %s13, 0
    %p117 = por %p115, %p116
    %p118 = scmp.ne.s32.totalorder %s110, %s112
    %p119 = scmp.eq.s32.totalorder %s18, 1
    %p120 = por %p118, %p119
    %p121 = scmp.ne.s32.totalorder %s112, %s113
    %p122 = scmp.eq.s32.totalorder %s18, 0
    %p123 = por %p121, %p122
    %p124 = scmp.ne.s32.totalorder %s112, %s113
    %p125 = scmp.eq.s32.totalorder %s19, 1
    %p126 = por %p124, %p125
    %p128 = scmp.ne.s32.totalorder %s113, %s127
    %p129 = scmp.eq.s32.totalorder %s19, 0
    %p130 = por %p128, %p129
    %s132 = sadd.s32 %s131, 1
    %p135 = scmp.eq.s32.totalorder %s13, 1
    %p136 = scmp.ne.s32.totalorder %s131, %s133
    %p137 = scmp.eq.s32.totalorder %s13, 0
    %p138 = por %p136, %p137
    %p139 = scmp.ne.s32.totalorder %s131, %s133
    %p140 = scmp.eq.s32.totalorder %s18, 1
    %p141 = por %p139, %p140
    %p142 = scmp.ne.s32.totalorder %s133, %s134
    %p143 = scmp.eq.s32.totalorder %s18, 0
    %p144 = por %p142, %p143
    %p145 = scmp.ne.s32.totalorder %s133, %s134
    %p146 = scmp.eq.s32.totalorder %s19, 1
    %p147 = por %p145, %p146
    %p149 = scmp.ne.s32.totalorder %s134, %s148
    %p150 = scmp.eq.s32.totalorder %s19, 0
    %p151 = por %p149, %p150
    %s153 = sadd.s32 %s152, 1
    %p156 = scmp.eq.s32.totalorder %s13, 1
    %p157 = scmp.ne.s32.totalorder %s152, %s154
    %p158 = scmp.eq.s32.totalorder %s13, 0
    %p159 = por %p157, %p158
    %p160 = scmp.ne.s32.totalorder %s152, %s154
    %p161 = scmp.eq.s32.totalorder %s18, 1
    %p162 = por %p160, %p161
    %p163 = scmp.ne.s32.totalorder %s154, %s155
    %p164 = scmp.eq.s32.totalorder %s18, 0
    %p165 = por %p163, %p164
    %p166 = scmp.ne.s32.totalorder %s154, %s155
    %p167 = scmp.eq.s32.totalorder %s19, 1
    %p168 = por %p166, %p167
    %p170 = scmp.ne.s32.totalorder %s155, %s169
    %p171 = scmp.eq.s32.totalorder %s19, 0
    %p172 = por %p170, %p171
    %s173 = ssub.s32 %s13, %s20
    %p174 = scmp.eq.s32.totalorder %s173, 0
    %s176 = sadd.s32 %s175, 1
    %s177 = scalar_select %p174, %s175, %s176
    %p180 = pneg %p174
    %p181 = scmp.eq.s32.totalorder %s13, 1
    %p182 = por %p180, %p181
    %p183 = scmp.ne.s32.totalorder %s175, %s178
    %p184 = scmp.eq.s32.totalorder %s13, 0
    %p185 = por %p183, %p184
    %p186 = scmp.ne.s32.totalorder %s175, %s178
    %p187 = scmp.eq.s32.totalorder %s18, 1
    %p188 = por %p186, %p187
    %p189 = scmp.ne.s32.totalorder %s178, %s179
    %p190 = scmp.eq.s32.totalorder %s18, 0
    %p191 = por %p189, %p190
    %p192 = scmp.ne.s32.totalorder %s178, %s179
    %p193 = scmp.eq.s32.totalorder %s19, 1
    %p194 = por %p192, %p193
    %p196 = scmp.ne.s32.totalorder %s179, %s195
    %p197 = scmp.eq.s32.totalorder %s19, 0
    %p198 = por %p196, %p197
    %p199 = scmp.le.s32.totalorder 1, %s13
    %p200 = scmp.lt.s32.totalorder %s13, 3
    %p201 = pnand %p199, %p200
    %p202 = pneg %p201
    // Predicated region
    $region9: #{apply.1} parent=5 // pred_check
      _
    $region10: #{apply.1} parent=5 // pred_check_branch
      %204 = sbr.rel (%p201) target = $region12
    $region11: #{apply.1} parent=5 // pred_region
      %s205 = ssub.s32 %s13, 1
      // Predicated region
      $region13: #{apply.1} parent=11 // pred_check
        %p206 = pneg %p60
      $region14: #{apply.1} parent=11 // pred_check_branch
        %208 = sbr.rel (%p206) target = $region16
      $region15: #{apply.1} parent=11 // pred_region
        _
      $region16: #{apply.1} parent=11 // pred_fallthru
        _
      // Predicated region
      $region17: #{apply.1} parent=11 // pred_check
        %p209 = pneg %p81
      $region18: #{apply.1} parent=11 // pred_check_branch
        %211 = sbr.rel (%p209) target = $region20
      $region19: #{apply.1} parent=11 // pred_region
        _
      $region20: #{apply.1} parent=11 // pred_fallthru
        _
      // Predicated region
      $region21: #{apply.1} parent=11 // pred_check
        %p212 = pneg %p102
      $region22: #{apply.1} parent=11 // pred_check_branch
        %214 = sbr.rel (%p212) target = $region24
      $region23: #{apply.1} parent=11 // pred_region
        _
      $region24: #{apply.1} parent=11 // pred_fallthru
        _
      // Predicated region
      $region25: #{apply.1} parent=11 // pred_check
        %p215 = pneg %p123
      $region26: #{apply.1} parent=11 // pred_check_branch
        %217 = sbr.rel (%p215) target = $region28
      $region27: #{apply.1} parent=11 // pred_region
        _
      $region28: #{apply.1} parent=11 // pred_fallthru
        _
      // Predicated region
      $region29: #{apply.1} parent=11 // pred_check
        %p218 = pneg %p144
      $region30: #{apply.1} parent=11 // pred_check_branch
        %220 = sbr.rel (%p218) target = $region32
      $region31: #{apply.1} parent=11 // pred_region
        _
      $region32: #{apply.1} parent=11 // pred_fallthru
        _
      // Predicated region
      $region33: #{apply.1} parent=11 // pred_check
        %p221 = pneg %p165
      $region34: #{apply.1} parent=11 // pred_check_branch
        %223 = sbr.rel (%p221) target = $region36
      $region35: #{apply.1} parent=11 // pred_region
        _
      $region36: #{apply.1} parent=11 // pred_fallthru
        _
    $region12: #{apply.1} parent=5 // pred_fallthru
      _
    %p224 = scmp.lt.s32.totalorder %s13, 2
    // Predicated region
    $region37: #{apply.1} parent=5 // pred_check
      %p225 = pneg %p224
    $region38: #{apply.1} parent=5 // pred_check_branch
      %227 = sbr.rel (%p225) target = $region40
    $region39: #{apply.1} parent=5 // pred_region
      // Predicated region
      $region41: #{apply.1} parent=39 // pred_check
        %p228 = pneg %p33
      $region42: #{apply.1} parent=39 // pred_check_branch
        %230 = sbr.rel (%p228) target = $region44
      $region43: #{apply.1} parent=39 // pred_region
        %p231 = scmp.lt.s32.totalorder %s13, 1
        %s232 = scalar_select %p231, %s13, 1
        %s233 = smul.addr %s232, 2
        %s234 = smul.addr %s233, 4
        %s235 = scalar_lea.vmem %s0, %s234
      $region44: #{apply.1} parent=39 // pred_fallthru
        _
    $region40: #{apply.1} parent=5 // pred_fallthru
      _
    %p236 = scmp.le.s32.totalorder 1, %s13
    %p237 = scmp.lt.s32.totalorder %s13, 3
    %p238 = pnand %p236, %p237
    %p239 = pneg %p238
    // Predicated region
    $region45: #{apply.1} parent=5 // pred_check
      _
    $region46: #{apply.1} parent=5 // pred_check_branch
      %241 = sbr.rel (%p238) target = $region48
    $region47: #{apply.1} parent=5 // pred_region
      %s242 = ssub.s32 %s13, 1
      %p243 = scmp.lt.s32.totalorder %s18, 1
      %s244 = scalar_select %p243, %s18, 1
      %s245 = smul.addr %s244, 2
      %s246 = smul.addr %s245, 4
      %s247 = scalar_lea.vmem %s0, %s246
      %p248 = pneg %p39
      %p249 = pneg %p36
      %p250 = pneg %p60
      %p251 = pneg %p57
      %p252 = pneg %p81
      %p253 = pneg %p78
      %p254 = pneg %p102
      %p255 = pneg %p99
      %p256 = pneg %p123
      %p257 = pneg %p120
      %p258 = pneg %p144
      %p259 = pneg %p141
      %p260 = pneg %p165
      %p261 = pneg %p162
      %p262 = pneg %p191
      %p263 = pneg %p188
      %p264 = scmp.lt.s32.totalorder %s18, 1
      %s265 = scalar_select %p264, %s18, 1
      %s266 = smul.addr %s265, 4
      %s267 = smul.addr %s266, 8
      %s268 = scalar_lea.vmem %s7, %s267
      %p269 = scmp.lt.s32.totalorder %s18, 1
      %s270 = scalar_select %p269, %s18, 1
      %s271 = smul.addr %s270, 2
      %s272 = smul.addr %s271, 4
      %s273 = scalar_lea.vmem %s0, %s272
      %p274 = scmp.lt.s32.totalorder %s18, 1
      %s275 = scalar_select %p274, %s18, 1
      %s276 = smul.addr %s275, 4
      %s277 = smul.addr %s276, 8
      %s278 = scalar_lea.vmem %s7, %s277
      %v280 = vld [vmem:[%s273] sm:$0xf]
      %v281 = vld [vmem:[%s273 + $0x4] sm:$0xf]
      %v284 = vunpack.c.l.b16 %v280
      %v285 = vunpack.c.l.b16 %v281
      %v286 = vpack.c.b16 %v285, %v284
      %v288 = vshrl.u32 %v286, 16
      %v290 = vrot.slane %v288, 7
      %v291 = vshll.u32 %v286, 16
      %v293 = vor.u32 %v290, %v291
      %vm295 = vcmask 1040384
      %vm296 = vsmask.f32 256
      %vm297 = vmand %vm295, %vm296
      %v298 = vsel %vm297, 0, %v293
      %v299 = vrot.slane %v291, 1
      %v300 = vor.u32 %v288, %v299
      %vm302 = vcmask 1047552
      %vm303 = vsmask.f32 7424
      %vm304 = vmand %vm302, %vm303
      %v305 = vsel %vm304, %v300, 0
      %v307 = vld [vmem:[%s1] sm:$0xf]
      %v308 = vld [vmem:[%s1 + $0x4] sm:$0xf]
      %v309 = vld [vmem:[%s1 + $0x8] sm:$0xf]
      %v310 = vld [vmem:[%s1 + $0xc] sm:$0xf]
      %v311 = vld [vmem:[%s1 + $0x10] sm:$0xf]
      %v312 = vld [vmem:[%s1 + $0x14] sm:$0xf]
      %v313 = vld [vmem:[%s1 + $0x18] sm:$0xf]
      %v314 = vld [vmem:[%s1 + $0x1c] sm:$0xf]
      %v315 = vld [vmem:[%s1 + $0x20] sm:$0xf]
      %v316 = vld [vmem:[%s1 + $0x24] sm:$0xf]
      %v317 = vld [vmem:[%s1 + $0x28] sm:$0xf]
      %v318 = vld [vmem:[%s1 + $0x2c] sm:$0xf]
      %v319 = vld [vmem:[%s1 + $0x30] sm:$0xf]
      %v320 = vld [vmem:[%s1 + $0x34] sm:$0xf]
      %v321 = vld [vmem:[%s1 + $0x38] sm:$0xf]
      %v322 = vld [vmem:[%s1 + $0x3c] sm:$0xf]
      %v323 = vld [vmem:[%s1 + $0x40] sm:$0xf]
      %v324 = vld [vmem:[%s1 + $0x44] sm:$0xf]
      %v325 = vld [vmem:[%s1 + $0x48] sm:$0xf]
      %v326 = vld [vmem:[%s1 + $0x4c] sm:$0xf]
      %v327 = vld [vmem:[%s1 + $0x50] sm:$0xf]
      %v328 = vld [vmem:[%s1 + $0x54] sm:$0xf]
      %v329 = vld [vmem:[%s1 + $0x58] sm:$0xf]
      %v330 = vld [vmem:[%s1 + $0x5c] sm:$0xf]
      %v331 = vld [vmem:[%s1 + $0x60] sm:$0xf]
      %v332 = vld [vmem:[%s1 + $0x64] sm:$0xf]
      %v333 = vld [vmem:[%s1 + $0x68] sm:$0xf]
      %v334 = vld [vmem:[%s1 + $0x6c] sm:$0xf]
      %v335 = vld [vmem:[%s1 + $0x70] sm:$0xf]
      %v336 = vld [vmem:[%s1 + $0x74] sm:$0xf]
      %v337 = vld [vmem:[%s1 + $0x78] sm:$0xf]
      %v338 = vld [vmem:[%s1 + $0x7c] sm:$0xf]
      %v339 = vld [vmem:[%s1 + $0x80] sm:$0xf]
      %v340 = vld [vmem:[%s1 + $0x84] sm:$0xf]
      %v341 = vld [vmem:[%s1 + $0x88] sm:$0xf]
      %v342 = vld [vmem:[%s1 + $0x8c] sm:$0xf]
      %v343 = vld [vmem:[%s1 + $0x90] sm:$0xf]
      %v344 = vld [vmem:[%s1 + $0x94] sm:$0xf]
      %v345 = vld [vmem:[%s1 + $0x98] sm:$0xf]
      %v346 = vld [vmem:[%s1 + $0x9c] sm:$0xf]
      %v347 = vld [vmem:[%s1 + $0xa0] sm:$0xf]
      %v348 = vld [vmem:[%s1 + $0xa4] sm:$0xf]
      %v349 = vld [vmem:[%s1 + $0xa8] sm:$0xf]
      %v350 = vld [vmem:[%s1 + $0xac] sm:$0xf]
      %v351 = vld [vmem:[%s1 + $0xb0] sm:$0xf]
      %v352 = vld [vmem:[%s1 + $0xb4] sm:$0xf]
      %v353 = vld [vmem:[%s1 + $0xb8] sm:$0xf]
      %v354 = vld [vmem:[%s1 + $0xbc] sm:$0xf]
      %v403 = vunpack.c.l.b16 %v307
      %v404 = vunpack.c.l.b16 %v308
      %v405 = vunpack.c.l.b16 %v309
      %v406 = vunpack.c.l.b16 %v310
      %v407 = vunpack.c.l.b16 %v311
      %v408 = vunpack.c.l.b16 %v312
      %v409 = vunpack.c.l.b16 %v313
      %v410 = vunpack.c.l.b16 %v314
      %v411 = vunpack.c.l.b16 %v315
      %v412 = vunpack.c.l.b16 %v316
      %v413 = vunpack.c.l.b16 %v317
      %v414 = vunpack.c.l.b16 %v318
      %v415 = vunpack.c.l.b16 %v319
      %v416 = vunpack.c.l.b16 %v320
      %v417 = vunpack.c.l.b16 %v321
      %v418 = vunpack.c.l.b16 %v322
      %v419 = vunpack.c.l.b16 %v323
      %v420 = vunpack.c.l.b16 %v324
      %v421 = vunpack.c.l.b16 %v325
      %v422 = vunpack.c.l.b16 %v326
      %v423 = vunpack.c.l.b16 %v327
      %v424 = vunpack.c.l.b16 %v328
      %v425 = vunpack.c.l.b16 %v329
      %v426 = vunpack.c.l.b16 %v330
      %v427 = vunpack.c.l.b16 %v331
      %v428 = vunpack.c.l.b16 %v332
      %v429 = vunpack.c.l.b16 %v333
      %v430 = vunpack.c.l.b16 %v334
      %v431 = vunpack.c.l.b16 %v335
      %v432 = vunpack.c.l.b16 %v336
      %v433 = vunpack.c.l.b16 %v337
      %v434 = vunpack.c.l.b16 %v338
      %v435 = vunpack.c.l.b16 %v339
      %v436 = vunpack.c.l.b16 %v340
      %v437 = vunpack.c.l.b16 %v341
      %v438 = vunpack.c.l.b16 %v342
      %v439 = vunpack.c.l.b16 %v343
      %v440 = vunpack.c.l.b16 %v344
      %v441 = vunpack.c.l.b16 %v345
      %v442 = vunpack.c.l.b16 %v346
      %v443 = vunpack.c.l.b16 %v347
      %v444 = vunpack.c.l.b16 %v348
      %v445 = vunpack.c.l.b16 %v349
      %v446 = vunpack.c.l.b16 %v350
      %v447 = vunpack.c.l.b16 %v351
      %v448 = vunpack.c.l.b16 %v352
      %v449 = vunpack.c.l.b16 %v353
      %v450 = vunpack.c.l.b16 %v354
      %v451 = vpack.c.b16 %v404, %v403
      %v452 = vpack.c.b16 %v406, %v405
      %v453 = vpack.c.b16 %v408, %v407
      %v454 = vpack.c.b16 %v410, %v409
      %v455 = vpack.c.b16 %v412, %v411
      %v456 = vpack.c.b16 %v414, %v413
      %v457 = vpack.c.b16 %v416, %v415
      %v458 = vpack.c.b16 %v418, %v417
      %v459 = vpack.c.b16 %v420, %v419
      %v460 = vpack.c.b16 %v422, %v421
      %v461 = vpack.c.b16 %v424, %v423
      %v462 = vpack.c.b16 %v426, %v425
      %v463 = vpack.c.b16 %v428, %v427
      %v464 = vpack.c.b16 %v430, %v429
      %v465 = vpack.c.b16 %v432, %v431
      %v466 = vpack.c.b16 %v434, %v433
      %v467 = vpack.c.b16 %v436, %v435
      %v468 = vpack.c.b16 %v438, %v437
      %v469 = vpack.c.b16 %v440, %v439
      %v470 = vpack.c.b16 %v442, %v441
      %v471 = vpack.c.b16 %v444, %v443
      %v472 = vpack.c.b16 %v446, %v445
      %v473 = vpack.c.b16 %v448, %v447
      %v474 = vpack.c.b16 %v450, %v449
      %499 = vmatprep.subr.bf16.mxu0 0
      %500 = vmatpush1.bf16.msra.mxu0 %v451
      %501 = vmatprep.subr.bf16.mxu0 0
      %502 = vmatpush1.bf16.msra.mxu0 %v452
      %503 = vmatprep.subr.bf16.mxu0 0
      %504 = vmatpush1.bf16.msra.mxu0 %v453
      %505 = vmatprep.subr.bf16.mxu0 0
      %506 = vmatpush1.bf16.msra.mxu0 %v454
      %507 = vmatprep.subr.bf16.mxu0 0
      %508 = vmatpush1.bf16.msra.mxu0 %v455
      %509 = vmatprep.subr.bf16.mxu0 0
      %510 = vmatpush1.bf16.msra.mxu0 %v456
      %511 = vmatprep.subr.bf16.mxu0 0
      %512 = vmatpush1.bf16.msra.mxu0 %v457
      %513 = vmatprep.subr.bf16.mxu0 0
      %514 = vmatpush1.bf16.msra.mxu0 %v458
      %515 = vmatprep.subr.bf16.mxu0 0
      %516 = vmatpush1.bf16.msra.mxu0 %v459
      %517 = vmatprep.subr.bf16.mxu0 0
      %518 = vmatpush1.bf16.msra.mxu0 %v460
      %519 = vmatprep.subr.bf16.mxu0 0
      %520 = vmatpush1.bf16.msra.mxu0 %v461
      %521 = vmatprep.subr.bf16.mxu0 0
      %522 = vmatpush1.bf16.msra.mxu0 %v462
      %523 = vmatprep.subr.bf16.mxu0 0
      %524 = vmatpush1.bf16.msra.mxu0 %v463
      %525 = vmatprep.subr.bf16.mxu0 0
      %526 = vmatpush1.bf16.msra.mxu0 %v464
      %527 = vmatprep.subr.bf16.mxu0 0
      %528 = vmatpush1.bf16.msra.mxu0 %v465
      %529 = vmatprep.subr.bf16.mxu0 0
      %530 = vmatpush1.bf16.msra.mxu0 %v466
      %531 = vmatprep.mubr.bf16.mxu0 %v286
      %532 = vmatmul.mubr.bf16.gmra.mrb[0].mxu0 %v298
      %v533 = vpop.f32.mrb[0].mxu0
      %v534 = vadd.f32 0.0, %v533
      %v535 = vpop.f32.mrb[0].mxu0
      %v536 = vpop.f32.mrb[0].mxu0
      %v537 = vadd.f32 0.0, %v536
      %v538 = vpop.f32.mrb[0].mxu0
      %539 = vdwg.mxu0
      %540 = vmatprep.subr.bf16.mxu0 0
      %541 = vmatpush1.bf16.msra.mxu0 %v467
      %542 = vmatprep.subr.bf16.mxu0 0
      %543 = vmatpush1.bf16.msra.mxu0 %v468
      %544 = vmatprep.subr.bf16.mxu0 0
      %545 = vmatpush1.bf16.msra.mxu0 %v469
      %546 = vmatprep.subr.bf16.mxu0 0
      %547 = vmatpush1.bf16.msra.mxu0 %v470
      %548 = vmatprep.subr.bf16.mxu0 0
      %549 = vmatpush1.bf16.msra.mxu0 %v471
      %550 = vmatprep.subr.bf16.mxu0 0
      %551 = vmatpush1.bf16.msra.mxu0 %v472
      %552 = vmatprep.subr.bf16.mxu0 0
      %553 = vmatpush1.bf16.msra.mxu0 %v473
      %554 = vmatprep.subr.bf16.mxu0 0
      %555 = vmatpush1.bf16.msra.mxu0 %v474
      %556 = vmatprep.subr.bf16.mxu0 0
      %557 = vmatpush1.bf16.msra.mxu0 0
      %558 = vmatprep.subr.bf16.mxu0 0
      %559 = vmatpush1.bf16.msra.mxu0 0
      %560 = vmatprep.subr.bf16.mxu0 0
      %561 = vmatpush1.bf16.msra.mxu0 0
      %562 = vmatprep.subr.bf16.mxu0 0
      %563 = vmatpush1.bf16.msra.mxu0 0
      %564 = vmatprep.subr.bf16.mxu0 0
      %565 = vmatpush1.bf16.msra.mxu0 0
      %566 = vmatprep.subr.bf16.mxu0 0
      %567 = vmatpush1.bf16.msra.mxu0 0
      %568 = vmatprep.subr.bf16.mxu0 0
      %569 = vmatpush1.bf16.msra.mxu0 0
      %570 = vmatprep.subr.bf16.mxu0 0
      %571 = vmatpush1.bf16.msra.mxu0 0
      %572 = vmatprep.mubr.bf16.mxu0 0
      %573 = vmatmul.mubr.bf16.gmra.mrb[0].mxu0 %v305
      %v574 = vpop.f32.mrb[0].mxu0
      %v575 = vadd.f32 %v534, %v574
      %v576 = vpop.f32.mrb[0].mxu0
      %v577 = vpop.f32.mrb[0].mxu0
      %v578 = vadd.f32 %v537, %v577
      %v579 = vpop.f32.mrb[0].mxu0
      %580 = vdwg.mxu0
      %v581 = vadd.f32 %v575, %v578
      %v582 = vrot.slane %v581, 4
      %v583 = vadd.f32 %v581, %v582
      %v584 = vrot.slane %v583, 2
      %v585 = vadd.f32 %v583, %v584
      %v586 = vrot.slane %v585, 1
      %v587 = vadd.f32 %v585, %v586
      %v588 = vmul.f32 %v575, %v575
      %v589 = vmul.f32 %v578, %v578
      %v590 = vadd.f32 %v588, %v589
      %v591 = vrot.slane %v590, 4
      %v592 = vadd.f32 %v590, %v591
      %v593 = vrot.slane %v592, 2
      %v594 = vadd.f32 %v592, %v593
      %v595 = vrot.slane %v594, 1
      %v596 = vadd.f32 %v594, %v595
      %v597 = vld [vmem:[%s4] sm:$0xff]
      %v598 = vld [vmem:[%s4 + $0x8] sm:$0xff]
      %v599 = vld [vmem:[%s4 + $0x10] sm:$0xff]
      %v600 = vld [vmem:[%s4 + $0x18] sm:$0xff]
      %v601 = vld [vmem:[%s4 + $0x20] sm:$0xff]
      %v602 = vld [vmem:[%s4 + $0x28] sm:$0xff]
      %v603 = vld [vmem:[%s4 + $0x30] sm:$0xff]
      %v604 = vld [vmem:[%s4 + $0x38] sm:$0xff]
      %v605 = vld [vmem:[%s4 + $0x40] sm:$0xff]
      %v606 = vld [vmem:[%s4 + $0x48] sm:$0xff]
      %v607 = vld [vmem:[%s4 + $0x50] sm:$0xff]
      %v608 = vld [vmem:[%s4 + $0x58] sm:$0xff]
      %v609 = vld [vmem:[%s4 + $0x60] sm:$0xff]
      %v610 = vld [vmem:[%s4 + $0x68] sm:$0xff]
      %v611 = vld [vmem:[%s4 + $0x70] sm:$0xff]
      %v612 = vld [vmem:[%s4 + $0x78] sm:$0xff]
      %613 = vmatprep.subr.mxu0 0.0
      %614 = vmatpush1.msra.mxu0 %v597
      %615 = vmatprep.subr.mxu0 0.0
      %616 = vmatpush1.msra.mxu0 %v598
      %617 = vmatprep.subr.mxu0 0.0
      %618 = vmatpush1.msra.mxu0 %v599
      %619 = vmatprep.subr.mxu0 0.0
      %620 = vmatpush1.msra.mxu0 %v600
      %621 = vmatprep.subr.mxu0 0.0
      %622 = vmatpush1.msra.mxu0 %v601
      %623 = vmatprep.subr.mxu0 0.0
      %624 = vmatpush1.msra.mxu0 %v602
      %625 = vmatprep.subr.mxu0 0.0
      %626 = vmatpush1.msra.mxu0 %v603
      %627 = vmatprep.subr.mxu0 0.0
      %628 = vmatpush1.msra.mxu0 %v604
      %629 = vmatprep.subr.mxu0 0.0
      %630 = vmatpush1.msra.mxu0 %v605
      %631 = vmatprep.subr.mxu0 0.0
      %632 = vmatpush1.msra.mxu0 %v606
      %633 = vmatprep.subr.mxu0 0.0
      %634 = vmatpush1.msra.mxu0 %v607
      %635 = vmatprep.subr.mxu0 0.0
      %636 = vmatpush1.msra.mxu0 %v608
      %637 = vmatprep.subr.mxu0 0.0
      %638 = vmatpush1.msra.mxu0 %v609
      %639 = vmatprep.subr.mxu0 0.0
      %640 = vmatpush1.msra.mxu0 %v610
      %641 = vmatprep.subr.mxu0 0.0
      %642 = vmatpush1.msra.mxu0 %v611
      %643 = vmatprep.subr.mxu0 0.0
      %644 = vmatpush1.msra.mxu0 %v612
      %645 = vmatprep.subr.mxu0 0.0
      %646 = vmatpush1.msra.mxu0 0.0
      %647 = vmatprep.subr.mxu0 0.0
      %648 = vmatpush1.msra.mxu0 0.0
      %649 = vmatprep.subr.mxu0 0.0
      %650 = vmatpush1.msra.mxu0 0.0
      %651 = vmatprep.subr.mxu0 0.0
      %652 = vmatpush1.msra.mxu0 0.0
      %653 = vmatprep.subr.mxu0 0.0
      %654 = vmatpush1.msra.mxu0 0.0
      %655 = vmatprep.subr.mxu0 0.0
      %656 = vmatpush1.msra.mxu0 0.0
      %657 = vmatprep.subr.mxu0 0.0
      %658 = vmatpush1.msra.mxu0 0.0
      %659 = vmatprep.subr.mxu0 0.0
      %660 = vmatpush1.msra.mxu0 0.0
      %661 = vmatprep.subr.mxu0 0.0
      %662 = vmatpush1.msra.mxu0 0.0
      %663 = vmatprep.subr.mxu0 0.0
      %664 = vmatpush1.msra.mxu0 0.0
      %665 = vmatprep.subr.mxu0 0.0
      %666 = vmatpush1.msra.mxu0 0.0
      %667 = vmatprep.subr.mxu0 0.0
      %668 = vmatpush1.msra.mxu0 0.0
      %669 = vmatprep.subr.mxu0 0.0
      %670 = vmatpush1.msra.mxu0 0.0
      %671 = vmatprep.subr.mxu0 0.0
      %672 = vmatpush1.msra.mxu0 0.0
      %673 = vmatprep.subr.mxu0 0.0
      %674 = vmatpush1.msra.mxu0 0.0
      %675 = vmatprep.subr.mxu0 0.0
      %676 = vmatpush1.msra.mxu0 0.0
      %677 = vmatprep.mubr.f32.mxu0 0.0
      %678 = vmatmul.mubr.f32.gmra.mrb[0].mxu0 %v587
      %v679 = vpop.f32.mrb[0].mxu0
      %v680 = vadd.f32 0.0, %v679
      %v681 = vpop.f32.mrb[0].mxu0
      %682 = vdwg.mxu0
      %683 = vmatprep.subr.mxu0 0.0
      %684 = vmatpush1.msra.mxu0 %v597
      %685 = vmatprep.subr.mxu0 0.0
      %686 = vmatpush1.msra.mxu0 %v598
      %687 = vmatprep.subr.mxu0 0.0
      %688 = vmatpush1.msra.mxu0 %v599
      %689 = vmatprep.subr.mxu0 0.0
      %690 = vmatpush1.msra.mxu0 %v600
      %691 = vmatprep.subr.mxu0 0.0
      %692 = vmatpush1.msra.mxu0 %v601
      %693 = vmatprep.subr.mxu0 0.0
      %694 = vmatpush1.msra.mxu0 %v602
      %695 = vmatprep.subr.mxu0 0.0
      %696 = vmatpush1.msra.mxu0 %v603
      %697 = vmatprep.subr.mxu0 0.0
      %698 = vmatpush1.msra.mxu0 %v604
      %699 = vmatprep.subr.mxu0 0.0
      %700 = vmatpush1.msra.mxu0 %v605
      %701 = vmatprep.subr.mxu0 0.0
      %702 = vmatpush1.msra.mxu0 %v606
      %703 = vmatprep.subr.mxu0 0.0
      %704 = vmatpush1.msra.mxu0 %v607
      %705 = vmatprep.subr.mxu0 0.0
      %706 = vmatpush1.msra.mxu0 %v608
      %707 = vmatprep.subr.mxu0 0.0
      %708 = vmatpush1.msra.mxu0 %v609
      %709 = vmatprep.subr.mxu0 0.0
      %710 = vmatpush1.msra.mxu0 %v610
      %711 = vmatprep.subr.mxu0 0.0
      %712 = vmatpush1.msra.mxu0 %v611
      %713 = vmatprep.subr.mxu0 0.0
      %714 = vmatpush1.msra.mxu0 %v612
      %715 = vmatprep.subr.mxu0 0.0
      %716 = vmatpush1.msra.mxu0 0.0
      %717 = vmatprep.subr.mxu0 0.0
      %718 = vmatpush1.msra.mxu0 0.0
      %719 = vmatprep.subr.mxu0 0.0
      %720 = vmatpush1.msra.mxu0 0.0
      %721 = vmatprep.subr.mxu0 0.0
      %722 = vmatpush1.msra.mxu0 0.0
      %723 = vmatprep.subr.mxu0 0.0
      %724 = vmatpush1.msra.mxu0 0.0
      %725 = vmatprep.subr.mxu0 0.0
      %726 = vmatpush1.msra.mxu0 0.0
      %727 = vmatprep.subr.mxu0 0.0
      %728 = vmatpush1.msra.mxu0 0.0
      %729 = vmatprep.subr.mxu0 0.0
      %730 = vmatpush1.msra.mxu0 0.0
      %731 = vmatprep.subr.mxu0 0.0
      %732 = vmatpush1.msra.mxu0 0.0
      %733 = vmatprep.subr.mxu0 0.0
      %734 = vmatpush1.msra.mxu0 0.0
      %735 = vmatprep.subr.mxu0 0.0
      %736 = vmatpush1.msra.mxu0 0.0
      %737 = vmatprep.subr.mxu0 0.0
      %738 = vmatpush1.msra.mxu0 0.0
      %739 = vmatprep.subr.mxu0 0.0
      %740 = vmatpush1.msra.mxu0 0.0
      %741 = vmatprep.subr.mxu0 0.0
      %742 = vmatpush1.msra.mxu0 0.0
      %743 = vmatprep.subr.mxu0 0.0
      %744 = vmatpush1.msra.mxu0 0.0
      %745 = vmatprep.subr.mxu0 0.0
      %746 = vmatpush1.msra.mxu0 0.0
      %747 = vmatprep.mubr.f32.mxu0 0.0
      %748 = vmatmul.mubr.f32.gmra.mrb[0].mxu0 %v596
      %v749 = vpop.f32.mrb[0].mxu0
      %v750 = vadd.f32 0.0, %v749
      %v751 = vpop.f32.mrb[0].mxu0
      %752 = vdwg.mxu0
      %v753 = vrcp.pop 256.0
      %v754 = vmul.f32 %v680, %v753
      %v755 = vmul.f32 %v750, %v753
      %v756 = vmul.f32 %v754, %v754
      %v757 = vsub.f32 %v755, %v756
      %v758 = vadd.f32 %v757, 1e-05
      %v759 = vrsqrt.pop %v758
      %v760 = vld [vmem:[%s5] sm:$0xff]
      %vm761 = vcmask 64512
      %v763 = vsel %vm761, %v759, 0
      %765 = vmatprep.subr.mxu0 0.0
      %766 = vmatpush1.msra.mxu0 %v760
      %767 = vmatprep.subr.mxu0 0.0
      %768 = vmatpush1.msra.mxu0 0.0
      %769 = vmatprep.subr.mxu0 0.0
      %770 = vmatpush1.msra.mxu0 0.0
      %771 = vmatprep.subr.mxu0 0.0
      %772 = vmatpush1.msra.mxu0 0.0
      %773 = vmatprep.subr.mxu0 0.0
      %774 = vmatpush1.msra.mxu0 0.0
      %775 = vmatprep.subr.mxu0 0.0
      %776 = vmatpush1.msra.mxu0 0.0
      %777 = vmatprep.subr.mxu0 0.0
      %778 = vmatpush1.msra.mxu0 0.0
      %779 = vmatprep.subr.mxu0 0.0
      %780 = vmatpush1.msra.mxu0 0.0
      %781 = vmatprep.subr.mxu0 0.0
      %782 = vmatpush1.msra.mxu0 0.0
      %783 = vmatprep.subr.mxu0 0.0
      %784 = vmatpush1.msra.mxu0 0.0
      %785 = vmatprep.subr.mxu0 0.0
      %786 = vmatpush1.msra.mxu0 0.0
      %787 = vmatprep.subr.mxu0 0.0
      %788 = vmatpush1.msra.mxu0 0.0
      %789 = vmatprep.subr.mxu0 0.0
      %790 = vmatpush1.msra.mxu0 0.0
      %791 = vmatprep.subr.mxu0 0.0
      %792 = vmatpush1.msra.mxu0 0.0
      %793 = vmatprep.subr.mxu0 0.0
      %794 = vmatpush1.msra.mxu0 0.0
      %795 = vmatprep.subr.mxu0 0.0
      %796 = vmatpush1.msra.mxu0 0.0
      %797 = vmatprep.subr.mxu0 0.0
      %798 = vmatpush1.msra.mxu0 0.0
      %799 = vmatprep.subr.mxu0 0.0
      %800 = vmatpush1.msra.mxu0 0.0
      %801 = vmatprep.subr.mxu0 0.0
      %802 = vmatpush1.msra.mxu0 0.0
      %803 = vmatprep.subr.mxu0 0.0
      %804 = vmatpush1.msra.mxu0 0.0
      %805 = vmatprep.subr.mxu0 0.0
      %806 = vmatpush1.msra.mxu0 0.0
      %807 = vmatprep.subr.mxu0 0.0
      %808 = vmatpush1.msra.mxu0 0.0
      %809 = vmatprep.subr.mxu0 0.0
      %810 = vmatpush1.msra.mxu0 0.0
      %811 = vmatprep.subr.mxu0 0.0
      %812 = vmatpush1.msra.mxu0 0.0
      %813 = vmatprep.subr.mxu0 0.0
      %814 = vmatpush1.msra.mxu0 0.0
      %815 = vmatprep.subr.mxu0 0.0
      %816 = vmatpush1.msra.mxu0 0.0
      %817 = vmatprep.subr.mxu0 0.0
      %818 = vmatpush1.msra.mxu0 0.0
      %819 = vmatprep.subr.mxu0 0.0
      %820 = vmatpush1.msra.mxu0 0.0
      %821 = vmatprep.subr.mxu0 0.0
      %822 = vmatpush1.msra.mxu0 0.0
      %823 = vmatprep.subr.mxu0 0.0
      %824 = vmatpush1.msra.mxu0 0.0
      %825 = vmatprep.subr.mxu0 0.0
      %826 = vmatpush1.msra.mxu0 0.0
      %827 = vmatprep.subr.mxu0 0.0
      %828 = vmatpush1.msra.mxu0 0.0
      %829 = vmatprep.mubr.f32.mxu0 0.0
      %830 = vmatmul.mubr.f32.gmra.mrb[0].mxu0 %v763
      %v831 = vpop.f32.mrb[0].mxu0
      %v832 = vadd.f32 0.0, %v831
      %v833 = vpop.f32.mrb[0].mxu0
      %834 = vdwg.mxu0
      %v835 = vsub.f32 0.0, %v754
      %v836 = vmul.f32 %v835, %v759
      %v838 = vsel %vm761, %v836, 0
      %840 = vmatprep.subr.mxu0 0.0
      %841 = vmatpush1.msra.mxu0 %v760
      %842 = vmatprep.subr.mxu0 0.0
      %843 = vmatpush1.msra.mxu0 0.0
      %844 = vmatprep.subr.mxu0 0.0
      %845 = vmatpush1.msra.mxu0 0.0
      %846 = vmatprep.subr.mxu0 0.0
      %847 = vmatpush1.msra.mxu0 0.0
      %848 = vmatprep.subr.mxu0 0.0
      %849 = vmatpush1.msra.mxu0 0.0
      %850 = vmatprep.subr.mxu0 0.0
      %851 = vmatpush1.msra.mxu0 0.0
      %852 = vmatprep.subr.mxu0 0.0
      %853 = vmatpush1.msra.mxu0 0.0
      %854 = vmatprep.subr.mxu0 0.0
      %855 = vmatpush1.msra.mxu0 0.0
      %856 = vmatprep.subr.mxu0 0.0
      %857 = vmatpush1.msra.mxu0 0.0
      %858 = vmatprep.subr.mxu0 0.0
      %859 = vmatpush1.msra.mxu0 0.0
      %860 = vmatprep.subr.mxu0 0.0
      %861 = vmatpush1.msra.mxu0 0.0
      %862 = vmatprep.subr.mxu0 0.0
      %863 = vmatpush1.msra.mxu0 0.0
      %864 = vmatprep.subr.mxu0 0.0
      %865 = vmatpush1.msra.mxu0 0.0
      %866 = vmatprep.subr.mxu0 0.0
      %867 = vmatpush1.msra.mxu0 0.0
      %868 = vmatprep.subr.mxu0 0.0
      %869 = vmatpush1.msra.mxu0 0.0
      %870 = vmatprep.subr.mxu0 0.0
      %871 = vmatpush1.msra.mxu0 0.0
      %872 = vmatprep.subr.mxu0 0.0
      %873 = vmatpush1.msra.mxu0 0.0
      %874 = vmatprep.subr.mxu0 0.0
      %875 = vmatpush1.msra.mxu0 0.0
      %876 = vmatprep.subr.mxu0 0.0
      %877 = vmatpush1.msra.mxu0 0.0
      %878 = vmatprep.subr.mxu0 0.0
      %879 = vmatpush1.msra.mxu0 0.0
      %880 = vmatprep.subr.mxu0 0.0
      %881 = vmatpush1.msra.mxu0 0.0
      %882 = vmatprep.subr.mxu0 0.0
      %883 = vmatpush1.msra.mxu0 0.0
      %884 = vmatprep.subr.mxu0 0.0
      %885 = vmatpush1.msra.mxu0 0.0
      %886 = vmatprep.subr.mxu0 0.0
      %887 = vmatpush1.msra.mxu0 0.0
      %888 = vmatprep.subr.mxu0 0.0
      %889 = vmatpush1.msra.mxu0 0.0
      %890 = vmatprep.subr.mxu0 0.0
      %891 = vmatpush1.msra.mxu0 0.0
      %892 = vmatprep.subr.mxu0 0.0
      %893 = vmatpush1.msra.mxu0 0.0
      %894 = vmatprep.subr.mxu0 0.0
      %895 = vmatpush1.msra.mxu0 0.0
      %896 = vmatprep.subr.mxu0 0.0
      %897 = vmatpush1.msra.mxu0 0.0
      %898 = vmatprep.subr.mxu0 0.0
      %899 = vmatpush1.msra.mxu0 0.0
      %900 = vmatprep.subr.mxu0 0.0
      %901 = vmatpush1.msra.mxu0 0.0
      %902 = vmatprep.subr.mxu0 0.0
      %903 = vmatpush1.msra.mxu0 0.0
      %904 = vmatprep.mubr.f32.mxu0 0.0
      %905 = vmatmul.mubr.f32.gmra.mrb[0].mxu0 %v838
      %v906 = vpop.f32.mrb[0].mxu0
      %v907 = vadd.f32 0.0, %v906
      %v908 = vpop.f32.mrb[0].mxu0
      %909 = vdwg.mxu0
      %v910 = vlaneseq
      %v911 = vshrl.u32 %v910, 7
      %v912 = vsub.s32 0, %v911
      %v913 = vrot.slane %v832, %v912
      %v914 = vmul.f32 %v575, %v913
      %v915 = vmul.f32 %v578, %v913
      %v916 = vlaneseq
      %v917 = vshrl.u32 %v916, 7
      %v918 = vsub.s32 0, %v917
      %v919 = vrot.slane %v907, %v918
      %v920 = vadd.f32 %v914, %v919
      %v921 = vadd.f32 %v915, %v919
      %vm922 = vcmp.ge.f32.partialorder %v920, 0.0
      %vm923 = vcmp.ge.f32.partialorder %v921, 0.0
      %v924 = vmul.f32 %v920, 0.01
      %v925 = vmul.f32 %v921, 0.01
      %v926 = vsel %vm922, %v920, %v924
      %v927 = vsel %vm923, %v921, %v925
      %v928 = vpack.c.bf16 %v927, %v926
      %v930 = vshrl.u32 %v928, 16
      %v932 = vrot.slane %v930, 7
      %v933 = vshll.u32 %v928, 16
      %v935 = vor.u32 %v932, %v933
      %v937 = vsel %vm297, 0, %v935
      %v938 = vrot.slane %v933, 1
      %v939 = vor.u32 %v930, %v938
      %v941 = vsel %vm304, %v939, 0
      %v942 = vld [vmem:[%s2] sm:$0xf]
      %v943 = vld [vmem:[%s2 + $0x4] sm:$0xf]
      %v944 = vld [vmem:[%s2 + $0x8] sm:$0xf]
      %v945 = vld [vmem:[%s2 + $0xc] sm:$0xf]
      %v946 = vld [vmem:[%s2 + $0x10] sm:$0xf]
      %v947 = vld [vmem:[%s2 + $0x14] sm:$0xf]
      %v948 = vld [vmem:[%s2 + $0x18] sm:$0xf]
      %v949 = vld [vmem:[%s2 + $0x1c] sm:$0xf]
      %v950 = vld [vmem:[%s2 + $0x20] sm:$0xf]
      %v951 = vld [vmem:[%s2 + $0x24] sm:$0xf]
      %v952 = vld [vmem:[%s2 + $0x28] sm:$0xf]
      %v953 = vld [vmem:[%s2 + $0x2c] sm:$0xf]
      %v954 = vld [vmem:[%s2 + $0x30] sm:$0xf]
      %v955 = vld [vmem:[%s2 + $0x34] sm:$0xf]
      %v956 = vld [vmem:[%s2 + $0x38] sm:$0xf]
      %v957 = vld [vmem:[%s2 + $0x3c] sm:$0xf]
      %v958 = vld [vmem:[%s2 + $0x40] sm:$0xf]
      %v959 = vld [vmem:[%s2 + $0x44] sm:$0xf]
      %v960 = vld [vmem:[%s2 + $0x48] sm:$0xf]
      %v961 = vld [vmem:[%s2 + $0x4c] sm:$0xf]
      %v962 = vld [vmem:[%s2 + $0x50] sm:$0xf]
      %v963 = vld [vmem:[%s2 + $0x54] sm:$0xf]
      %v964 = vld [vmem:[%s2 + $0x58] sm:$0xf]
      %v965 = vld [vmem:[%s2 + $0x5c] sm:$0xf]
      %v966 = vld [vmem:[%s2 + $0x60] sm:$0xf]
      %v967 = vld [vmem:[%s2 + $0x64] sm:$0xf]
      %v968 = vld [vmem:[%s2 + $0x68] sm:$0xf]
      %v969 = vld [vmem:[%s2 + $0x6c] sm:$0xf]
      %v970 = vld [vmem:[%s2 + $0x70] sm:$0xf]
      %v971 = vld [vmem:[%s2 + $0x74] sm:$0xf]
      %v972 = vld [vmem:[%s2 + $0x78] sm:$0xf]
      %v973 = vld [vmem:[%s2 + $0x7c] sm:$0xf]
      %v974 = vld [vmem:[%s2 + $0x80] sm:$0xf]
      %v975 = vld [vmem:[%s2 + $0x84] sm:$0xf]
      %v976 = vld [vmem:[%s2 + $0x88] sm:$0xf]
      %v977 = vld [vmem:[%s2 + $0x8c] sm:$0xf]
      %v978 = vld [vmem:[%s2 + $0x90] sm:$0xf]
      %v979 = vld [vmem:[%s2 + $0x94] sm:$0xf]
      %v980 = vld [vmem:[%s2 + $0x98] sm:$0xf]
      %v981 = vld [vmem:[%s2 + $0x9c] sm:$0xf]
      %v982 = vld [vmem:[%s2 + $0xa0] sm:$0xf]
      %v983 = vld [vmem:[%s2 + $0xa4] sm:$0xf]
      %v984 = vld [vmem:[%s2 + $0xa8] sm:$0xf]
      %v985 = vld [vmem:[%s2 + $0xac] sm:$0xf]
      %v986 = vld [vmem:[%s2 + $0xb0] sm:$0xf]
      %v987 = vld [vmem:[%s2 + $0xb4] sm:$0xf]
      %v988 = vld [vmem:[%s2 + $0xb8] sm:$0xf]
      %v989 = vld [vmem:[%s2 + $0xbc] sm:$0xf]
      %v1038 = vunpack.c.l.b16 %v942
      %v1039 = vunpack.c.l.b16 %v943
      %v1040 = vunpack.c.l.b16 %v944
      %v1041 = vunpack.c.l.b16 %v945
      %v1042 = vunpack.c.l.b16 %v946
      %v1043 = vunpack.c.l.b16 %v947
      %v1044 = vunpack.c.l.b16 %v948
      %v1045 = vunpack.c.l.b16 %v949
      %v1046 = vunpack.c.l.b16 %v950
      %v1047 = vunpack.c.l.b16 %v951
      %v1048 = vunpack.c.l.b16 %v952
      %v1049 = vunpack.c.l.b16 %v953
      %v1050 = vunpack.c.l.b16 %v954
      %v1051 = vunpack.c.l.b16 %v955
      %v1052 = vunpack.c.l.b16 %v956
      %v1053 = vunpack.c.l.b16 %v957
      %v1054 = vunpack.c.l.b16 %v958
      %v1055 = vunpack.c.l.b16 %v959
      %v1056 = vunpack.c.l.b16 %v960
      %v1057 = vunpack.c.l.b16 %v961
      %v1058 = vunpack.c.l.b16 %v962
      %v1059 = vunpack.c.l.b16 %v963
      %v1060 = vunpack.c.l.b16 %v964
      %v1061 = vunpack.c.l.b16 %v965
      %v1062 = vunpack.c.l.b16 %v966
      %v1063 = vunpack.c.l.b16 %v967
      %v1064 = vunpack.c.l.b16 %v968
      %v1065 = vunpack.c.l.b16 %v969
      %v1066 = vunpack.c.l.b16 %v970
      %v1067 = vunpack.c.l.b16 %v971
      %v1068 = vunpack.c.l.b16 %v972
      %v1069 = vunpack.c.l.b16 %v973
      %v1070 = vunpack.c.l.b16 %v974
      %v1071 = vunpack.c.l.b16 %v975
      %v1072 = vunpack.c.l.b16 %v976
      %v1073 = vunpack.c.l.b16 %v977
      %v1074 = vunpack.c.l.b16 %v978
      %v1075 = vunpack.c.l.b16 %v979
      %v1076 = vunpack.c.l.b16 %v980
      %v1077 = vunpack.c.l.b16 %v981
      %v1078 = vunpack.c.l.b16 %v982
      %v1079 = vunpack.c.l.b16 %v983
      %v1080 = vunpack.c.l.b16 %v984
      %v1081 = vunpack.c.l.b16 %v985
      %v1082 = vunpack.c.l.b16 %v986
      %v1083 = vunpack.c.l.b16 %v987
      %v1084 = vunpack.c.l.b16 %v988
      %v1085 = vunpack.c.l.b16 %v989
      %v1086 = vpack.c.b16 %v1039, %v1038
      %v1087 = vpack.c.b16 %v1041, %v1040
      %v1088 = vpack.c.b16 %v1043, %v1042
      %v1089 = vpack.c.b16 %v1045, %v1044
      %v1090 = vpack.c.b16 %v1047, %v1046
      %v1091 = vpack.c.b16 %v1049, %v1048
      %v1092 = vpack.c.b16 %v1051, %v1050
      %v1093 = vpack.c.b16 %v1053, %v1052
      %v1094 = vpack.c.b16 %v1055, %v1054
      %v1095 = vpack.c.b16 %v1057, %v1056
      %v1096 = vpack.c.b16 %v1059, %v1058
      %v1097 = vpack.c.b16 %v1061, %v1060
      %v1098 = vpack.c.b16 %v1063, %v1062
      %v1099 = vpack.c.b16 %v1065, %v1064
      %v1100 = vpack.c.b16 %v1067, %v1066
      %v1101 = vpack.c.b16 %v1069, %v1068
      %v1102 = vpack.c.b16 %v1071, %v1070
      %v1103 = vpack.c.b16 %v1073, %v1072
      %v1104 = vpack.c.b16 %v1075, %v1074
      %v1105 = vpack.c.b16 %v1077, %v1076
      %v1106 = vpack.c.b16 %v1079, %v1078
      %v1107 = vpack.c.b16 %v1081, %v1080
      %v1108 = vpack.c.b16 %v1083, %v1082
      %v1109 = vpack.c.b16 %v1085, %v1084
      %1134 = vmatprep.subr.bf16.mxu0 0
      %1135 = vmatpush1.bf16.msra.mxu0 %v1086
      %1136 = vmatprep.subr.bf16.mxu0 0
      %1137 = vmatpush1.bf16.msra.mxu0 %v1087
      %1138 = vmatprep.subr.bf16.mxu0 0
      %1139 = vmatpush1.bf16.msra.mxu0 %v1088
      %1140 = vmatprep.subr.bf16.mxu0 0
      %1141 = vmatpush1.bf16.msra.mxu0 %v1089
      %1142 = vmatprep.subr.bf16.mxu0 0
      %1143 = vmatpush1.bf16.msra.mxu0 %v1090
      %1144 = vmatprep.subr.bf16.mxu0 0
      %1145 = vmatpush1.bf16.msra.mxu0 %v1091
      %1146 = vmatprep.subr.bf16.mxu0 0
      %1147 = vmatpush1.bf16.msra.mxu0 %v1092
      %1148 = vmatprep.subr.bf16.mxu0 0
      %1149 = vmatpush1.bf16.msra.mxu0 %v1093
      %1150 = vmatprep.subr.bf16.mxu0 0
      %1151 = vmatpush1.bf16.msra.mxu0 %v1094
      %1152 = vmatprep.subr.bf16.mxu0 0
      %1153 = vmatpush1.bf16.msra.mxu0 %v1095
      %1154 = vmatprep.subr.bf16.mxu0 0
      %1155 = vmatpush1.bf16.msra.mxu0 %v1096
      %1156 = vmatprep.subr.bf16.mxu0 0
      %1157 = vmatpush1.bf16.msra.mxu0 %v1097
      %1158 = vmatprep.subr.bf16.mxu0 0
      %1159 = vmatpush1.bf16.msra.mxu0 %v1098
      %1160 = vmatprep.subr.bf16.mxu0 0
      %1161 = vmatpush1.bf16.msra.mxu0 %v1099
      %1162 = vmatprep.subr.bf16.mxu0 0
      %1163 = vmatpush1.bf16.msra.mxu0 %v1100
      %1164 = vmatprep.subr.bf16.mxu0 0
      %1165 = vmatpush1.bf16.msra.mxu0 %v1101
      %1166 = vmatprep.mubr.bf16.mxu0 %v928
      %1167 = vmatmul.mubr.bf16.gmra.mrb[0].mxu0 %v937
      %v1168 = vpop.f32.mrb[0].mxu0
      %v1169 = vadd.f32 0.0, %v1168
      %v1170 = vpop.f32.mrb[0].mxu0
      %v1171 = vpop.f32.mrb[0].mxu0
      %v1172 = vadd.f32 0.0, %v1171
      %v1173 = vpop.f32.mrb[0].mxu0
      %1174 = vdwg.mxu0
      %1175 = vmatprep.subr.bf16.mxu0 0
      %1176 = vmatpush1.bf16.msra.mxu0 %v1102
      %1177 = vmatprep.subr.bf16.mxu0 0
      %1178 = vmatpush1.bf16.msra.mxu0 %v1103
      %1179 = vmatprep.subr.bf16.mxu0 0
      %1180 = vmatpush1.bf16.msra.mxu0 %v1104
      %1181 = vmatprep.subr.bf16.mxu0 0
      %1182 = vmatpush1.bf16.msra.mxu0 %v1105
      %1183 = vmatprep.subr.bf16.mxu0 0
      %1184 = vmatpush1.bf16.msra.mxu0 %v1106
      %1185 = vmatprep.subr.bf16.mxu0 0
      %1186 = vmatpush1.bf16.msra.mxu0 %v1107
      %1187 = vmatprep.subr.bf16.mxu0 0
      %1188 = vmatpush1.bf16.msra.mxu0 %v1108
      %1189 = vmatprep.subr.bf16.mxu0 0
      %1190 = vmatpush1.bf16.msra.mxu0 %v1109
      %1191 = vmatprep.subr.bf16.mxu0 0
      %1192 = vmatpush1.bf16.msra.mxu0 0
      %1193 = vmatprep.subr.bf16.mxu0 0
      %1194 = vmatpush1.bf16.msra.mxu0 0
      %1195 = vmatprep.subr.bf16.mxu0 0
      %1196 = vmatpush1.bf16.msra.mxu0 0
      %1197 = vmatprep.subr.bf16.mxu0 0
      %1198 = vmatpush1.bf16.msra.mxu0 0
      %1199 = vmatprep.subr.bf16.mxu0 0
      %1200 = vmatpush1.bf16.msra.mxu0 0
      %1201 = vmatprep.subr.bf16.mxu0 0
      %1202 = vmatpush1.bf16.msra.mxu0 0
      %1203 = vmatprep.subr.bf16.mxu0 0
      %1204 = vmatpush1.bf16.msra.mxu0 0
      %1205 = vmatprep.subr.bf16.mxu0 0
      %1206 = vmatpush1.bf16.msra.mxu0 0
      %1207 = vmatprep.mubr.bf16.mxu0 0
      %1208 = vmatmul.mubr.bf16.gmra.mrb[0].mxu0 %v941
      %v1209 = vpop.f32.mrb[0].mxu0
      %v1210 = vadd.f32 %v1169, %v1209
      %v1211 = vpop.f32.mrb[0].mxu0
      %v1212 = vpop.f32.mrb[0].mxu0
      %v1213 = vadd.f32 %v1172, %v1212
      %v1214 = vpop.f32.mrb[0].mxu0
      %1215 = vdwg.mxu0
      %v1216 = vadd.f32 %v1210, %v1213
      %v1217 = vrot.slane %v1216, 4
      %v1218 = vadd.f32 %v1216, %v1217
      %v1219 = vrot.slane %v1218, 2
      %v1220 = vadd.f32 %v1218, %v1219
      %v1221 = vrot.slane %v1220, 1
      %v1222 = vadd.f32 %v1220, %v1221
      %v1223 = vmul.f32 %v1210, %v1210
      %v1224 = vmul.f32 %v1213, %v1213
      %v1225 = vadd.f32 %v1223, %v1224
      %v1226 = vrot.slane %v1225, 4
      %v1227 = vadd.f32 %v1225, %v1226
      %v1228 = vrot.slane %v1227, 2
      %v1229 = vadd.f32 %v1227, %v1228
      %v1230 = vrot.slane %v1229, 1
      %v1231 = vadd.f32 %v1229, %v1230
      %1232 = vmatprep.subr.mxu0 0.0
      %1233 = vmatpush1.msra.mxu0 %v597
      %1234 = vmatprep.subr.mxu0 0.0
      %1235 = vmatpush1.msra.mxu0 %v598
      %1236 = vmatprep.subr.mxu0 0.0
      %1237 = vmatpush1.msra.mxu0 %v599
      %1238 = vmatprep.subr.mxu0 0.0
      %1239 = vmatpush1.msra.mxu0 %v600
      %1240 = vmatprep.subr.mxu0 0.0
      %1241 = vmatpush1.msra.mxu0 %v601
      %1242 = vmatprep.subr.mxu0 0.0
      %1243 = vmatpush1.msra.mxu0 %v602
      %1244 = vmatprep.subr.mxu0 0.0
      %1245 = vmatpush1.msra.mxu0 %v603
      %1246 = vmatprep.subr.mxu0 0.0
      %1247 = vmatpush1.msra.mxu0 %v604
      %1248 = vmatprep.subr.mxu0 0.0
      %1249 = vmatpush1.msra.mxu0 %v605
      %1250 = vmatprep.subr.mxu0 0.0
      %1251 = vmatpush1.msra.mxu0 %v606
      %1252 = vmatprep.subr.mxu0 0.0
      %1253 = vmatpush1.msra.mxu0 %v607
      %1254 = vmatprep.subr.mxu0 0.0
      %1255 = vmatpush1.msra.mxu0 %v608
      %1256 = vmatprep.subr.mxu0 0.0
      %1257 = vmatpush1.msra.mxu0 %v609
      %1258 = vmatprep.subr.mxu0 0.0
      %1259 = vmatpush1.msra.mxu0 %v610
      %1260 = vmatprep.subr.mxu0 0.0
      %1261 = vmatpush1.msra.mxu0 %v611
      %1262 = vmatprep.subr.mxu0 0.0
      %1263 = vmatpush1.msra.mxu0 %v612
      %1264 = vmatprep.subr.mxu0 0.0
      %1265 = vmatpush1.msra.mxu0 0.0
      %1266 = vmatprep.subr.mxu0 0.0
      %1267 = vmatpush1.msra.mxu0 0.0
      %1268 = vmatprep.subr.mxu0 0.0
      %1269 = vmatpush1.msra.mxu0 0.0
      %1270 = vmatprep.subr.mxu0 0.0
      %1271 = vmatpush1.msra.mxu0 0.0
      %1272 = vmatprep.subr.mxu0 0.0
      %1273 = vmatpush1.msra.mxu0 0.0
      %1274 = vmatprep.subr.mxu0 0.0
      %1275 = vmatpush1.msra.mxu0 0.0
      %1276 = vmatprep.subr.mxu0 0.0
      %1277 = vmatpush1.msra.mxu0 0.0
      %1278 = vmatprep.subr.mxu0 0.0
      %1279 = vmatpush1.msra.mxu0 0.0
      %1280 = vmatprep.subr.mxu0 0.0
      %1281 = vmatpush1.msra.mxu0 0.0
      %1282 = vmatprep.subr.mxu0 0.0
      %1283 = vmatpush1.msra.mxu0 0.0
      %1284 = vmatprep.subr.mxu0 0.0
      %1285 = vmatpush1.msra.mxu0 0.0
      %1286 = vmatprep.subr.mxu0 0.0
      %1287 = vmatpush1.msra.mxu0 0.0
      %1288 = vmatprep.subr.mxu0 0.0
      %1289 = vmatpush1.msra.mxu0 0.0
      %1290 = vmatprep.subr.mxu0 0.0
      %1291 = vmatpush1.msra.mxu0 0.0
      %1292 = vmatprep.subr.mxu0 0.0
      %1293 = vmatpush1.msra.mxu0 0.0
      %1294 = vmatprep.subr.mxu0 0.0
      %1295 = vmatpush1.msra.mxu0 0.0
      %1296 = vmatprep.mubr.f32.mxu0 0.0
      %1297 = vmatmul.mubr.f32.gmra.mrb[0].mxu0 %v1222
      %v1298 = vpop.f32.mrb[0].mxu0
      %v1299 = vadd.f32 0.0, %v1298
      %v1300 = vpop.f32.mrb[0].mxu0
      %1301 = vdwg.mxu0
      %1302 = vmatprep.subr.mxu0 0.0
      %1303 = vmatpush1.msra.mxu0 %v597
      %1304 = vmatprep.subr.mxu0 0.0
      %1305 = vmatpush1.msra.mxu0 %v598
      %1306 = vmatprep.subr.mxu0 0.0
      %1307 = vmatpush1.msra.mxu0 %v599
      %1308 = vmatprep.subr.mxu0 0.0
      %1309 = vmatpush1.msra.mxu0 %v600
      %1310 = vmatprep.subr.mxu0 0.0
      %1311 = vmatpush1.msra.mxu0 %v601
      %1312 = vmatprep.subr.mxu0 0.0
      %1313 = vmatpush1.msra.mxu0 %v602
      %1314 = vmatprep.subr.mxu0 0.0
      %1315 = vmatpush1.msra.mxu0 %v603
      %1316 = vmatprep.subr.mxu0 0.0
      %1317 = vmatpush1.msra.mxu0 %v604
      %1318 = vmatprep.subr.mxu0 0.0
      %1319 = vmatpush1.msra.mxu0 %v605
      %1320 = vmatprep.subr.mxu0 0.0
      %1321 = vmatpush1.msra.mxu0 %v606
      %1322 = vmatprep.subr.mxu0 0.0
      %1323 = vmatpush1.msra.mxu0 %v607
      %1324 = vmatprep.subr.mxu0 0.0
      %1325 = vmatpush1.msra.mxu0 %v608
      %1326 = vmatprep.subr.mxu0 0.0
      %1327 = vmatpush1.msra.mxu0 %v609
      %1328 = vmatprep.subr.mxu0 0.0
      %1329 = vmatpush1.msra.mxu0 %v610
      %1330 = vmatprep.subr.mxu0 0.0
      %1331 = vmatpush1.msra.mxu0 %v611
      %1332 = vmatprep.subr.mxu0 0.0
      %1333 = vmatpush1.msra.mxu0 %v612
      %1334 = vmatprep.subr.mxu0 0.0
      %1335 = vmatpush1.msra.mxu0 0.0
      %1336 = vmatprep.subr.mxu0 0.0
      %1337 = vmatpush1.msra.mxu0 0.0
      %1338 = vmatprep.subr.mxu0 0.0
      %1339 = vmatpush1.msra.mxu0 0.0
      %1340 = vmatprep.subr.mxu0 0.0
      %1341 = vmatpush1.msra.mxu0 0.0
      %1342 = vmatprep.subr.mxu0 0.0
      %1343 = vmatpush1.msra.mxu0 0.0
      %1344 = vmatprep.subr.mxu0 0.0
      %1345 = vmatpush1.msra.mxu0 0.0
      %1346 = vmatprep.subr.mxu0 0.0
      %1347 = vmatpush1.msra.mxu0 0.0
      %1348 = vmatprep.subr.mxu0 0.0
      %1349 = vmatpush1.msra.mxu0 0.0
      %1350 = vmatprep.subr.mxu0 0.0
      %1351 = vmatpush1.msra.mxu0 0.0
      %1352 = vmatprep.subr.mxu0 0.0
      %1353 = vmatpush1.msra.mxu0 0.0
      %1354 = vmatprep.subr.mxu0 0.0
      %1355 = vmatpush1.msra.mxu0 0.0
      %1356 = vmatprep.subr.mxu0 0.0
      %1357 = vmatpush1.msra.mxu0 0.0
      %1358 = vmatprep.subr.mxu0 0.0
      %1359 = vmatpush1.msra.mxu0 0.0
      %1360 = vmatprep.subr.mxu0 0.0
      %1361 = vmatpush1.msra.mxu0 0.0
      %1362 = vmatprep.subr.mxu0 0.0
      %1363 = vmatpush1.msra.mxu0 0.0
      %1364 = vmatprep.subr.mxu0 0.0
      %1365 = vmatpush1.msra.mxu0 0.0
      %1366 = vmatprep.mubr.f32.mxu0 0.0
      %1367 = vmatmul.mubr.f32.gmra.mrb[0].mxu0 %v1231
      %v1368 = vpop.f32.mrb[0].mxu0
      %v1369 = vadd.f32 0.0, %v1368
      %v1370 = vpop.f32.mrb[0].mxu0
      %1371 = vdwg.mxu0
      %v1372 = vmul.f32 %v1299, %v753
      %v1373 = vmul.f32 %v1369, %v753
      %v1374 = vmul.f32 %v1372, %v1372
      %v1375 = vsub.f32 %v1373, %v1374
      %v1376 = vadd.f32 %v1375, 1e-05
      %v1377 = vrsqrt.pop %v1376
      %v1379 = vsel %vm761, %v1377, 0
      %1381 = vmatprep.subr.mxu0 0.0
      %1382 = vmatpush1.msra.mxu0 %v760
      %1383 = vmatprep.subr.mxu0 0.0
      %1384 = vmatpush1.msra.mxu0 0.0
      %1385 = vmatprep.subr.mxu0 0.0
      %1386 = vmatpush1.msra.mxu0 0.0
      %1387 = vmatprep.subr.mxu0 0.0
      %1388 = vmatpush1.msra.mxu0 0.0
      %1389 = vmatprep.subr.mxu0 0.0
      %1390 = vmatpush1.msra.mxu0 0.0
      %1391 = vmatprep.subr.mxu0 0.0
      %1392 = vmatpush1.msra.mxu0 0.0
      %1393 = vmatprep.subr.mxu0 0.0
      %1394 = vmatpush1.msra.mxu0 0.0
      %1395 = vmatprep.subr.mxu0 0.0
      %1396 = vmatpush1.msra.mxu0 0.0
      %1397 = vmatprep.subr.mxu0 0.0
      %1398 = vmatpush1.msra.mxu0 0.0
      %1399 = vmatprep.subr.mxu0 0.0
      %1400 = vmatpush1.msra.mxu0 0.0
      %1401 = vmatprep.subr.mxu0 0.0
      %1402 = vmatpush1.msra.mxu0 0.0
      %1403 = vmatprep.subr.mxu0 0.0
      %1404 = vmatpush1.msra.mxu0 0.0
      %1405 = vmatprep.subr.mxu0 0.0
      %1406 = vmatpush1.msra.mxu0 0.0
      %1407 = vmatprep.subr.mxu0 0.0
      %1408 = vmatpush1.msra.mxu0 0.0
      %1409 = vmatprep.subr.mxu0 0.0
      %1410 = vmatpush1.msra.mxu0 0.0
      %1411 = vmatprep.subr.mxu0 0.0
      %1412 = vmatpush1.msra.mxu0 0.0
      %1413 = vmatprep.subr.mxu0 0.0
      %1414 = vmatpush1.msra.mxu0 0.0
      %1415 = vmatprep.subr.mxu0 0.0
      %1416 = vmatpush1.msra.mxu0 0.0
      %1417 = vmatprep.subr.mxu0 0.0
      %1418 = vmatpush1.msra.mxu0 0.0
      %1419 = vmatprep.subr.mxu0 0.0
      %1420 = vmatpush1.msra.mxu0 0.0
      %1421 = vmatprep.subr.mxu0 0.0
      %1422 = vmatpush1.msra.mxu0 0.0
      %1423 = vmatprep.subr.mxu0 0.0
      %1424 = vmatpush1.msra.mxu0 0.0
      %1425 = vmatprep.subr.mxu0 0.0
      %1426 = vmatpush1.msra.mxu0 0.0
      %1427 = vmatprep.subr.mxu0 0.0
      %1428 = vmatpush1.msra.mxu0 0.0
      %1429 = vmatprep.subr.mxu0 0.0
      %1430 = vmatpush1.msra.mxu0 0.0
      %1431 = vmatprep.subr.mxu0 0.0
      %1432 = vmatpush1.msra.mxu0 0.0
      %1433 = vmatprep.subr.mxu0 0.0
      %1434 = vmatpush1.msra.mxu0 0.0
      %1435 = vmatprep.subr.mxu0 0.0
      %1436 = vmatpush1.msra.mxu0 0.0
      %1437 = vmatprep.subr.mxu0 0.0
      %1438 = vmatpush1.msra.mxu0 0.0
      %1439 = vmatprep.subr.mxu0 0.0
      %1440 = vmatpush1.msra.mxu0 0.0
      %1441 = vmatprep.subr.mxu0 0.0
      %1442 = vmatpush1.msra.mxu0 0.0
      %1443 = vmatprep.subr.mxu0 0.0
      %1444 = vmatpush1.msra.mxu0 0.0
      %1445 = vmatprep.mubr.f32.mxu0 0.0
      %1446 = vmatmul.mubr.f32.gmra.mrb[0].mxu0 %v1379
      %v1447 = vpop.f32.mrb[0].mxu0
      %v1448 = vadd.f32 0.0, %v1447
      %v1449 = vpop.f32.mrb[0].mxu0
      %1450 = vdwg.mxu0
      %v1451 = vsub.f32 0.0, %v1372
      %v1452 = vmul.f32 %v1451, %v1377
      %v1454 = vsel %vm761, %v1452, 0
      %1456 = vmatprep.subr.mxu0 0.0
      %1457 = vmatpush1.msra.mxu0 %v760
      %1458 = vmatprep.subr.mxu0 0.0
      %1459 = vmatpush1.msra.mxu0 0.0
      %1460 = vmatprep.subr.mxu0 0.0
      %1461 = vmatpush1.msra.mxu0 0.0
      %1462 = vmatprep.subr.mxu0 0.0
      %1463 = vmatpush1.msra.mxu0 0.0
      %1464 = vmatprep.subr.mxu0 0.0
      %1465 = vmatpush1.msra.mxu0 0.0
      %1466 = vmatprep.subr.mxu0 0.0
      %1467 = vmatpush1.msra.mxu0 0.0
      %1468 = vmatprep.subr.mxu0 0.0
      %1469 = vmatpush1.msra.mxu0 0.0
      %1470 = vmatprep.subr.mxu0 0.0
      %1471 = vmatpush1.msra.mxu0 0.0
      %1472 = vmatprep.subr.mxu0 0.0
      %1473 = vmatpush1.msra.mxu0 0.0
      %1474 = vmatprep.subr.mxu0 0.0
      %1475 = vmatpush1.msra.mxu0 0.0
      %1476 = vmatprep.subr.mxu0 0.0
      %1477 = vmatpush1.msra.mxu0 0.0
      %1478 = vmatprep.subr.mxu0 0.0
      %1479 = vmatpush1.msra.mxu0 0.0
      %1480 = vmatprep.subr.mxu0 0.0
      %1481 = vmatpush1.msra.mxu0 0.0
      %1482 = vmatprep.subr.mxu0 0.0
      %1483 = vmatpush1.msra.mxu0 0.0
      %1484 = vmatprep.subr.mxu0 0.0
      %1485 = vmatpush1.msra.mxu0 0.0
      %1486 = vmatprep.subr.mxu0 0.0
      %1487 = vmatpush1.msra.mxu0 0.0
      %1488 = vmatprep.subr.mxu0 0.0
      %1489 = vmatpush1.msra.mxu0 0.0
      %1490 = vmatprep.subr.mxu0 0.0
      %1491 = vmatpush1.msra.mxu0 0.0
      %1492 = vmatprep.subr.mxu0 0.0
      %1493 = vmatpush1.msra.mxu0 0.0
      %1494 = vmatprep.subr.mxu0 0.0
      %1495 = vmatpush1.msra.mxu0 0.0
      %1496 = vmatprep.subr.mxu0 0.0
      %1497 = vmatpush1.msra.mxu0 0.0
      %1498 = vmatprep.subr.mxu0 0.0
      %1499 = vmatpush1.msra.mxu0 0.0
      %1500 = vmatprep.subr.mxu0 0.0
      %1501 = vmatpush1.msra.mxu0 0.0
      %1502 = vmatprep.subr.mxu0 0.0
      %1503 = vmatpush1.msra.mxu0 0.0
      %1504 = vmatprep.subr.mxu0 0.0
      %1505 = vmatpush1.msra.mxu0 0.0
      %1506 = vmatprep.subr.mxu0 0.0
      %1507 = vmatpush1.msra.mxu0 0.0
      %1508 = vmatprep.subr.mxu0 0.0
      %1509 = vmatpush1.msra.mxu0 0.0
      %1510 = vmatprep.subr.mxu0 0.0
      %1511 = vmatpush1.msra.mxu0 0.0
      %1512 = vmatprep.subr.mxu0 0.0
      %1513 = vmatpush1.msra.mxu0 0.0
      %1514 = vmatprep.subr.mxu0 0.0
      %1515 = vmatpush1.msra.mxu0 0.0
      %1516 = vmatprep.subr.mxu0 0.0
      %1517 = vmatpush1.msra.mxu0 0.0
      %1518 = vmatprep.subr.mxu0 0.0
      %1519 = vmatpush1.msra.mxu0 0.0
      %1520 = vmatprep.mubr.f32.mxu0 0.0
      %1521 = vmatmul.mubr.f32.gmra.mrb[0].mxu0 %v1454
      %v1522 = vpop.f32.mrb[0].mxu0
      %v1523 = vadd.f32 0.0, %v1522
      %v1524 = vpop.f32.mrb[0].mxu0
      %1525 = vdwg.mxu0
      %v1526 = vlaneseq
      %v1527 = vshrl.u32 %v1526, 7
      %v1528 = vsub.s32 0, %v1527
      %v1529 = vrot.slane %v1448, %v1528
      %v1530 = vmul.f32 %v1210, %v1529
      %v1531 = vmul.f32 %v1213, %v1529
      %v1532 = vlaneseq
      %v1533 = vshrl.u32 %v1532, 7
      %v1534 = vsub.s32 0, %v1533
      %v1535 = vrot.slane %v1523, %v1534
      %v1536 = vadd.f32 %v1530, %v1535
      %v1537 = vadd.f32 %v1531, %v1535
      %vm1538 = vcmp.ge.f32.partialorder %v1536, 0.0
      %vm1539 = vcmp.ge.f32.partialorder %v1537, 0.0
      %v1540 = vmul.f32 %v1536, 0.01
      %v1541 = vmul.f32 %v1537, 0.01
      %v1542 = vsel %vm1538, %v1536, %v1540
      %v1543 = vsel %vm1539, %v1537, %v1541
      %v1544 = vpack.c.bf16 %v1543, %v1542
      %v1545 = vld [vmem:[%s3] sm:$0xff]
      %v1546 = vld [vmem:[%s3 + $0x8] sm:$0xff]
      %v1547 = vld [vmem:[%s3 + $0x10] sm:$0xff]
      %v1548 = vld [vmem:[%s3 + $0x18] sm:$0xff]
      %v1549 = vld [vmem:[%s3 + $0x20] sm:$0xff]
      %v1550 = vld [vmem:[%s3 + $0x28] sm:$0xff]
      %v1551 = vld [vmem:[%s3 + $0x30] sm:$0xff]
      %v1552 = vld [vmem:[%s3 + $0x38] sm:$0xff]
      %v1553 = vld [vmem:[%s3 + $0x40] sm:$0xff]
      %v1554 = vld [vmem:[%s3 + $0x48] sm:$0xff]
      %v1555 = vld [vmem:[%s3 + $0x50] sm:$0xff]
      %v1556 = vld [vmem:[%s3 + $0x58] sm:$0xff]
      %v1557 = vld [vmem:[%s3 + $0x60] sm:$0xff]
      %v1558 = vld [vmem:[%s3 + $0x68] sm:$0xff]
      %v1559 = vld [vmem:[%s3 + $0x70] sm:$0xff]
      %v1560 = vld [vmem:[%s3 + $0x78] sm:$0xff]
      %v1577 = vunpack.c.l.b16 %v1545
      %v1578 = vunpack.c.h.b16 %v1545
      %v1579 = vunpack.c.l.b16 %v1546
      %v1580 = vunpack.c.h.b16 %v1546
      %v1581 = vunpack.c.l.b16 %v1547
      %v1582 = vunpack.c.h.b16 %v1547
      %v1583 = vunpack.c.l.b16 %v1548
      %v1584 = vunpack.c.h.b16 %v1548
      %v1585 = vunpack.c.l.b16 %v1549
      %v1586 = vunpack.c.h.b16 %v1549
      %v1587 = vunpack.c.l.b16 %v1550
      %v1588 = vunpack.c.h.b16 %v1550
      %v1589 = vunpack.c.l.b16 %v1551
      %v1590 = vunpack.c.h.b16 %v1551
      %v1591 = vunpack.c.l.b16 %v1552
      %v1592 = vunpack.c.h.b16 %v1552
      %v1593 = vunpack.c.l.b16 %v1553
      %v1594 = vunpack.c.h.b16 %v1553
      %v1595 = vunpack.c.l.b16 %v1554
      %v1596 = vunpack.c.h.b16 %v1554
      %v1597 = vunpack.c.l.b16 %v1555
      %v1598 = vunpack.c.h.b16 %v1555
      %v1599 = vunpack.c.l.b16 %v1556
      %v1600 = vunpack.c.h.b16 %v1556
      %v1601 = vunpack.c.l.b16 %v1557
      %v1602 = vunpack.c.h.b16 %v1557
      %v1603 = vunpack.c.l.b16 %v1558
      %v1604 = vunpack.c.h.b16 %v1558
      %v1605 = vunpack.c.l.b16 %v1559
      %v1606 = vunpack.c.h.b16 %v1559
      %v1607 = vunpack.c.l.b16 %v1560
      %v1608 = vunpack.c.h.b16 %v1560
      %v1609 = vpack.c.b16 %v1579, %v1577
      %v1610 = vpack.c.b16 %v1580, %v1578
      %v1611 = vpack.c.b16 %v1583, %v1581
      %v1612 = vpack.c.b16 %v1584, %v1582
      %v1613 = vpack.c.b16 %v1587, %v1585
      %v1614 = vpack.c.b16 %v1588, %v1586
      %v1615 = vpack.c.b16 %v1591, %v1589
      %v1616 = vpack.c.b16 %v1592, %v1590
      %v1617 = vpack.c.b16 %v1595, %v1593
      %v1618 = vpack.c.b16 %v1596, %v1594
      %v1619 = vpack.c.b16 %v1599, %v1597
      %v1620 = vpack.c.b16 %v1600, %v1598
      %v1621 = vpack.c.b16 %v1603, %v1601
      %v1622 = vpack.c.b16 %v1604, %v1602
      %v1623 = vpack.c.b16 %v1607, %v1605
      %v1624 = vpack.c.b16 %v1608, %v1606
      %1641 = vmatprep.subr.bf16.mxu0 %v1610
      %1642 = vmatpush1.bf16.msra.mxu0 %v1609
      %1643 = vmatprep.subr.bf16.mxu0 %v1612
      %1644 = vmatpush1.bf16.msra.mxu0 %v1611
      %1645 = vmatprep.subr.bf16.mxu0 %v1614
      %1646 = vmatpush1.bf16.msra.mxu0 %v1613
      %1647 = vmatprep.subr.bf16.mxu0 %v1616
      %1648 = vmatpush1.bf16.msra.mxu0 %v1615
      %1649 = vmatprep.subr.bf16.mxu0 %v1618
      %1650 = vmatpush1.bf16.msra.mxu0 %v1617
      %1651 = vmatprep.subr.bf16.mxu0 %v1620
      %1652 = vmatpush1.bf16.msra.mxu0 %v1619
      %1653 = vmatprep.subr.bf16.mxu0 %v1622
      %1654 = vmatpush1.bf16.msra.mxu0 %v1621
      %1655 = vmatprep.subr.bf16.mxu0 %v1624
      %1656 = vmatpush1.bf16.msra.mxu0 %v1623
      %1657 = vmatprep.subr.bf16.mxu0 0
      %1658 = vmatpush1.bf16.msra.mxu0 0
      %1659 = vmatprep.subr.bf16.mxu0 0
      %1660 = vmatpush1.bf16.msra.mxu0 0
      %1661 = vmatprep.subr.bf16.mxu0 0
      %1662 = vmatpush1.bf16.msra.mxu0 0
      %1663 = vmatprep.subr.bf16.mxu0 0
      %1664 = vmatpush1.bf16.msra.mxu0 0
      %1665 = vmatprep.subr.bf16.mxu0 0
      %1666 = vmatpush1.bf16.msra.mxu0 0
      %1667 = vmatprep.subr.bf16.mxu0 0
      %1668 = vmatpush1.bf16.msra.mxu0 0
      %1669 = vmatprep.subr.bf16.mxu0 0
      %1670 = vmatpush1.bf16.msra.mxu0 0
      %1671 = vmatprep.subr.bf16.mxu0 0
      %1672 = vmatpush1.bf16.msra.mxu0 0
      %1673 = vmatprep.mubr.bf16.mxu0 0
      %1674 = vmatmul.mubr.bf16.gmra.mrb[0].mxu0 %v1544
      %v1675 = vpop.f32.mrb[0].mxu0
      %v1676 = vadd.f32 0.0, %v1675
      %v1677 = vpop.f32.mrb[0].mxu0
      %v1678 = vadd.f32 0.0, %v1677
      %v1679 = vpop.f32.mrb[0].mxu0
      %v1680 = vadd.f32 0.0, %v1679
      %v1681 = vpop.f32.mrb[0].mxu0
      %v1682 = vadd.f32 0.0, %v1681
      %1683 = vdwg.mxu0
      %v1684 = vld [vmem:[%s6] sm:$0x3]
      %v1686 = vlaneseq
      %v1687 = vshrl.u32 %v1686, 7
      %v1688 = vsub.s32 0, %v1687
      %v1689 = vrot.slane %v1684, %v1688
      %v1690 = vlaneseq
      %v1691 = vshrl.u32 %v1690, 7
      %v1692 = vsub.s32 1, %v1691
      %v1693 = vrot.slane %v1684, %v1692
      %v1696 = vadd.f32 %v1676, %v1689
      %v1697 = vadd.f32 %v1678, %v1693
      %v1698 = vadd.f32 %v1680, %v1689
      %v1699 = vadd.f32 %v1682, %v1693
      %1700 = vst [vmem:[%s278] sm:$0xff] %v1696
      %1701 = vst [vmem:[%s278 + $0x8] sm:$0xff] %v1697
      %1702 = vst [vmem:[%s278 + $0x10] sm:$0xff] %v1698
      %1703 = vst [vmem:[%s278 + $0x18] sm:$0xff] %v1699
      %p1704 = scmp.lt.s32.totalorder %s18, 1
      %s1705 = scalar_select %p1704, %s18, 1
      %s1706 = smul.addr %s1705, 4
      %s1707 = smul.addr %s1706, 8
      %s1708 = scalar_lea.vmem %s7, %s1707
      // Predicated region
      $region49: #{apply.1} parent=47 // pred_check
        %p1709 = pneg %p188
      $region50: #{apply.1} parent=47 // pred_check_branch
        %1711 = sbr.rel (%p1709) target = $region52
      $region51: #{apply.1} parent=47 // pred_region
        _
      $region52: #{apply.1} parent=47 // pred_fallthru
        _
    $region48: #{apply.1} parent=5 // pred_fallthru
      _
    %p1712 = scmp.le.s32.totalorder 2, %s13
    // Predicated region
    $region53: #{apply.1} parent=5 // pred_check
      %p1713 = pneg %p1712
    $region54: #{apply.1} parent=5 // pred_check_branch
      %1715 = sbr.rel (%p1713) target = $region56
    $region55: #{apply.1} parent=5 // pred_region
      %s1716 = ssub.s32 %s13, 2
      // Predicated region
      $region57: #{apply.1} parent=55 // pred_check
        %p1717 = pneg %p194
      $region58: #{apply.1} parent=55 // pred_check_branch
        %1719 = sbr.rel (%p1717) target = $region60
      $region59: #{apply.1} parent=55 // pred_region
        %p1720 = scmp.lt.s32.totalorder %s19, 1
        %s1721 = scalar_select %p1720, %s19, 1
        %s1722 = smul.addr %s1721, 4
        %s1723 = smul.addr %s1722, 8
        %s1724 = scalar_lea.vmem %s7, %s1723
      $region60: #{apply.1} parent=55 // pred_fallthru
        _
    $region56: #{apply.1} parent=5 // pred_fallthru
      _
  $region6: #{apply.1} parent=0 // loop_footer
    %s17 = sadd.s32 1, %s13
  $region7: #{apply.1} parent=0 // loop_footer_branch
    %12 = sbr.rel target = $region3
  $region8: #{apply.1} parent=0 // loop_exit
    _

</llo_original>
